<compile_context>
chip_gen: v7x
topology: tpu7x:2x2x1
jax: 0.10.0
libtpu: 0.0.40
codegen_flags: <defaults>
</compile_context>

<pallas_src>
import jax
import jax.numpy as jnp
from jax.experimental import pallas as pl
from jax.experimental.pallas import tpu as pltpu

H_C = 224            # hard-coded nn.Upsample target in PolyTransform
W_C = 224
NUM_VERTICES = 50
FPN_CH = 256
RED_CH = 64


# ---------------------------------------------------------------------------
# Pallas kernel: fpn_reduction = Conv2d(256,64,1) -> ReLU -> Conv2d(64,64,1) -> ReLU
# for ALL five pyramid levels in a single call.  Channel-major (transposed) layout:
#   x tile   : (256, TM) bf16        lane-dense input DMA
#   w1T / w2T: (64,256)/(64,64) bf16 selected per tile via scalar-prefetched level id
#   out tile : (64, TM)  f32         lane-dense, unmasked stores
# ---------------------------------------------------------------------------
def _fpn_reduction_kernel(lvl_ref, x_ref, w1_ref, b1_ref, w2_ref, b2_ref, o_ref):
    del lvl_ref                                                     # used only by index_maps
    x = x_ref[...]                                                  # (256, TM) bf16
    h = jnp.dot(w1_ref[...], x, preferred_element_type=jnp.float32) + b1_ref[...]
    h = jnp.maximum(h, 0.0).astype(jnp.bfloat16)                    # (64, TM)
    y = jnp.dot(w2_ref[...], h, preferred_element_type=jnp.float32) + b2_ref[...]
    o_ref[...] = jnp.maximum(y, 0.0).astype(o_ref.dtype)


def fpn_reduction_all(feats_nhwc, red_params, *, tm=512):
    """feats_nhwc: list of (B,h,w,256). Returns list of (B,64,h,w) float32 (NCHW)."""
    cin, cmid = FPN_CH, RED_CH
    segs, lvl_ids, meta = [], [], []
    col = 0
    for lvl, f in enumerate(feats_nhwc):
        B, h, w, _ = f.shape
        npix = B * h * w
        ntiles = -(-npix // tm)
        npad = ntiles * tm
        xt = f.reshape(npix, cin).T.astype(jnp.bfloat16)            # (256, npix) channel-major
        xt = jnp.pad(xt, ((0, 0), (0, npad - npix)))
        segs.append(xt)
        lvl_ids += [lvl] * ntiles
        meta.append((col, B, h, w))
        col += npad
    xT = jnp.concatenate(segs, axis=1)                              # (256, total)
    total = xT.shape[1]
    lvl_arr = jnp.asarray(lvl_ids, dtype=jnp.int32)                 # (total // tm,)

    w1T = jnp.stack([p['w1'].T for p in red_params]).astype(jnp.bfloat16)   # (5,64,256)
    b1 = jnp.stack([p['b1'].reshape(cmid, 1) for p in red_params])          # (5,64,1) f32
    w2T = jnp.stack([p['w2'].T for p in red_params]).astype(jnp.bfloat16)   # (5,64,64)
    b2 = jnp.stack([p['b2'].reshape(cmid, 1) for p in red_params])          # (5,64,1) f32

    outT = pl.pallas_call(
        _fpn_reduction_kernel,
        out_shape=jax.ShapeDtypeStruct((cmid, total), jnp.float32),
        grid_spec=pltpu.PrefetchScalarGridSpec(
            num_scalar_prefetch=1,
            grid=(total // tm,),
            in_specs=[
                pl.BlockSpec((cin, tm), lambda i, lvl: (0, i)),
                pl.BlockSpec((None, cmid, cin), lambda i, lvl: (lvl[i], 0, 0)),
                pl.BlockSpec((None, cmid, 1), lambda i, lvl: (lvl[i], 0, 0)),
                pl.BlockSpec((None, cmid, cmid), lambda i, lvl: (lvl[i], 0, 0)),
                pl.BlockSpec((None, cmid, 1), lambda i, lvl: (lvl[i], 0, 0)),
            ],
            out_specs=pl.BlockSpec((cmid, tm), lambda i, lvl: (0, i)),
        ),
        compiler_params=pltpu.CompilerParams(dimension_semantics=("parallel",)),
    )(lvl_arr, xT, w1T, b1, w2T, b2)
    # NOTE: padded columns hold ReLU(bias) garbage; they are sliced away below.

    reduced = []
    for (start, B, h, w) in meta:
        seg = outT[:, start:start + B * h * w]                      # (64, B*h*w)
        reduced.append(seg.reshape(cmid, B, h, w).transpose(1, 0, 2, 3))   # (B,64,h,w)
    return reduced


# ---------------------------------------------------------------------------
# Composed upsample(224, bilinear, align_corners=True) + AddCoords + grid_sample
# (bilinear, align_corners=True, padding_mode='zeros') evaluated directly on the
# small reduced maps.  Exactly equals materializing the 224x224 maps.
# ---------------------------------------------------------------------------
def _interp_matrix(out_size, in_size):
    """M (out,in): M @ v == 1D linear interpolation of v with align_corners=True."""
    if in_size == 1:
        return jnp.ones((out_size, 1), jnp.float32)
    pos = jnp.arange(out_size, dtype=jnp.float32) * (in_size - 1) / (out_size - 1)
    lo = jnp.clip(jnp.floor(pos), 0, in_size - 2).astype(jnp.int32)
    frac = pos - lo.astype(jnp.float32)
    return (jax.nn.one_hot(lo, in_size, dtype=jnp.float32) * (1.0 - frac)[:, None]
            + jax.nn.one_hot(lo + 1, in_size, dtype=jnp.float32) * frac[:, None])


def _neighbor_weights(pix, size):
    """grid_sample taps along one axis with padding_mode='zeros' semantics.
    pix: float pixel coords (B,N). Returns (w0, w1, i0_clipped, i1_clipped)."""
    i0f = jnp.floor(pix)
    frac = pix - i0f
    i0 = i0f.astype(jnp.int32)
    i1 = i0 + 1
    w0 = jnp.where((i0 >= 0) & (i0 < size), 1.0 - frac, 0.0)
    w1 = jnp.where((i1 >= 0) & (i1 < size), frac, 0.0)
    return w0, w1, jnp.clip(i0, 0, size - 1), jnp.clip(i1, 0, size - 1)


# ---------------------------------------------------------------------------
# Params / forward
# ---------------------------------------------------------------------------
def init_params(key):
    keys = jax.random.split(key, 8)

    def w(k, shape, scale=0.05):
        return scale * jax.random.normal(k, shape, jnp.float32)

    params = {
        'g2r_w': w(keys[0], (3,)),                      # Conv2d(1,3,1) weight (per out channel)
        'g2r_b': w(keys[1], (3,)),
        # TODO(synk): `resnet()` FPN backbone is an external module; deterministic stand-in params.
        'fpn_w': w(keys[2], (3, FPN_CH)),
        'fpn_b': w(keys[3], (FPN_CH,)),
        # TODO(synk): DeformableVertexTransformer is an external module; stand-in head params.
        'perc_w': w(keys[4], (5 * RED_CH + 2, 2)),
        'perc_b': w(keys[5], (2,)),
        'red': [],
    }
    kred = jax.random.split(keys[6], 20)
    for lvl in range(5):                                # fpn_reduction_p2 .. p6
        params['red'].append({
            'w1': w(kred[4 * lvl + 0], (FPN_CH, RED_CH)),
            'b1': w(kred[4 * lvl + 1], (RED_CH,)),
            'w2': w(kred[4 * lvl + 2], (RED_CH, RED_CH)),
            'b2': w(kred[4 * lvl + 3], (RED_CH,)),
        })
    return params


def poly_transform_forward(params, input_nchw, contours):
    B, _, Hin, Win = input_nchw.shape
    x = jnp.transpose(input_nchw, (0, 2, 3, 1)).astype(jnp.float32)     # NCHW -> NHWC, (B,H,W,1)

    # gray_to_rgb: Conv2d(1,3,1) == per-output-channel affine of the single gray channel.
    rgb = x * params['g2r_w'] + params['g2r_b']                          # (B,H,W,3)

    # TODO(synk): the real ResNet-FPN backbone is external; deterministic stand-in:
    # strided average pooling + 1x1 projection to 256 channels for each pyramid level P2..P6.
    feats = []
    for s in (4, 8, 16, 32, 64):
        pooled = rgb.reshape(B, Hin // s, s, Win // s, s, 3).mean(axis=(2, 4))
        feats.append(jnp.einsum('bhwc,cd->bhwd', pooled, params['fpn_w']) + params['fpn_b'])

    # Single fused Pallas call for all five fpn_reduction heads -> list of (B,64,h,w).
    reduced = fpn_reduction_all(feats, params['red'])

    # Composed upsample + AddCoords + grid_sample at the 50 contour points.
    grid_x = contours[..., 0] / 112.0 - 1.0                              # (B,N) in [-1,1]
    grid_y = contours[..., 1] / 112.0 - 1.0
    px = (grid_x + 1.0) * 0.5 * (W_C - 1)                                # align_corners=True
    py = (grid_y + 1.0) * 0.5 * (H_C - 1)
    wx0, wx1, jx0, jx1 = _neighbor_weights(px, W_C)
    wy0, wy1, iy0, iy1 = _neighbor_weights(py, H_C)

    samples = []
    for Xl in reduced:                                                   # (B,64,h,w)
        _, _, h, w = Xl.shape
        Ry = _interp_matrix(H_C, h)                                      # (224, h)
        Rx = _interp_matrix(W_C, w)                                      # (224, w)
        wy = wy0[..., None] * Ry[iy0] + wy1[..., None] * Ry[iy1]         # (B,N,h)
        wx = wx0[..., None] * Rx[jx0] + wx1[..., None] * Rx[jx1]         # (B,N,w)
        samples.append(jnp.einsum('bnp,bcpq,bnq->bnc', wy, Xl, wx))      # (B,N,64)

    # AddCoords (external; standard CoordConv semantics assumed: append x/y channels in [-1,1];
    # 320 + 2 = 322 matches the 50*322 head declared in the module), sampled analytically.
    xxv = jnp.linspace(-1.0, 1.0, W_C, dtype=jnp.float32)
    yyv = jnp.linspace(-1.0, 1.0, H_C, dtype=jnp.float32)
    coord_x = (wy0 + wy1) * (wx0 * xxv[jx0] + wx1 * xxv[jx1])            # (B,N)
    coord_y = (wx0 + wx1) * (wy0 * yyv[iy0] + wy1 * yyv[iy1])
    sample = jnp.concatenate(samples + [coord_x[..., None], coord_y[..., None]], axis=-1)

    # TODO(synk): DeformableVertexTransformer (perceiver) is external; deterministic per-vertex
    # linear stand-in producing the (B,50,2) refinement the module reshapes to.
    offs = jnp.einsum('bnc,cd->bnd', sample, params['perc_w']) + params['perc_b']
    vertices = offs.reshape(-1, NUM_VERTICES, 2) + contours
    return vertices


if __name__ == "__main__":
    key = jax.random.PRNGKey(0)
    k_in, k_ct, k_par = jax.random.split(key, 3)

    # small shapes: batch=2, gray image 64x64 (pyramid strides 4..64 all divide 64)
    x = jax.random.normal(k_in, (2, 1, 64, 64), dtype=jnp.float32)       # NCHW like the module
    contours = jax.random.uniform(k_ct, (2, NUM_VERTICES, 2), jnp.float32, 0.0, 224.0)
    params = init_params(k_par)

    fwd = jax.jit(poly_transform_forward)
    vertices = fwd(params, x, contours)
    jax.block_until_ready(vertices)
    assert vertices.shape == (2, NUM_VERTICES, 2)
    assert vertices.dtype == jnp.float32
    print("KERNEL_OK")
</pallas_src>

<mosaic_0001>
module attributes {stable_mosaic.version = 11 : i64} {
  func.func @_fpn_reduction_kernel(%arg0: i32, %arg1: memref<5xi32, #tpu.memory_space<smem>>, %arg2: memref<256x512xbf16, #tpu.memory_space<vmem>>, %arg3: memref<1x64x256xbf16, #tpu.memory_space<vmem>>, %arg4: memref<1x64x1xf32, #tpu.memory_space<vmem>>, %arg5: memref<1x64x64xbf16, #tpu.memory_space<vmem>>, %arg6: memref<1x64x1xf32, #tpu.memory_space<vmem>>, %arg7: memref<64x512xf32, #tpu.memory_space<vmem>>) attributes {dimension_semantics = [#tpu.dimension_semantics<parallel>], iteration_bounds = array<i64: 5>, scalar_prefetch = 1 : i64, scratch_operands = 0 : i64, tpu.core_type = #tpu.core_type<tc>, window_params = [{transform_indices = @transform_0, window_bounds = array<i64: 256, 512>}, {transform_indices = @transform_1, window_bounds = array<i64: 1, 64, 256>}, {transform_indices = @transform_2, window_bounds = array<i64: 1, 64, 1>}, {transform_indices = @transform_3, window_bounds = array<i64: 1, 64, 64>}, {transform_indices = @transform_4, window_bounds = array<i64: 1, 64, 1>}, {transform_indices = @transform_5, window_bounds = array<i64: 64, 512>}]} {
    %c0 = arith.constant 0 : index
    %c0_0 = arith.constant 0 : index
    %0 = vector.load %arg2[%c0, %c0_0] : memref<256x512xbf16, #tpu.memory_space<vmem>>, vector<256x512xbf16>
    %c0_1 = arith.constant 0 : index
    %c0_2 = arith.constant 0 : index
    %c0_3 = arith.constant 0 : index
    %1 = vector.load %arg3[%c0_1, %c0_2, %c0_3] : memref<1x64x256xbf16, #tpu.memory_space<vmem>>, vector<1x64x256xbf16>
    %2 = vector.shape_cast %1 : vector<1x64x256xbf16> to vector<64x256xbf16>
    %cst = arith.constant dense<0.000000e+00> : vector<64x512xf32>
    %3 = tpu.matmul %2, %0, %cst {dimension_numbers = #tpu.dot_dimension_numbers<[1], [0], [0], [1], [0, 0, 1, 1], [], []>} : vector<64x256xbf16>, vector<256x512xbf16>, vector<64x512xf32> -> vector<64x512xf32>
    %c0_4 = arith.constant 0 : index
    %c0_5 = arith.constant 0 : index
    %c0_6 = arith.constant 0 : index
    %4 = vector.load %arg4[%c0_4, %c0_5, %c0_6] : memref<1x64x1xf32, #tpu.memory_space<vmem>>, vector<1x64x1xf32>
    %5 = vector.shape_cast %4 : vector<1x64x1xf32> to vector<64x1xf32>
    %6 = vector.broadcast %5 : vector<64x1xf32> to vector<64x512xf32>
    %7 = arith.addf %3, %6 : vector<64x512xf32>
    %cst_7 = arith.constant 0.000000e+00 : f32
    %8 = vector.broadcast %cst_7 : f32 to vector<64x512xf32>
    %9 = arith.maximumf %7, %8 : vector<64x512xf32>
    %10 = arith.truncf %9 : vector<64x512xf32> to vector<64x512xbf16>
    %c0_8 = arith.constant 0 : index
    %c0_9 = arith.constant 0 : index
    %c0_10 = arith.constant 0 : index
    %11 = vector.load %arg5[%c0_8, %c0_9, %c0_10] : memref<1x64x64xbf16, #tpu.memory_space<vmem>>, vector<1x64x64xbf16>
    %12 = vector.shape_cast %11 : vector<1x64x64xbf16> to vector<64x64xbf16>
    %cst_11 = arith.constant dense<0.000000e+00> : vector<64x512xf32>
    %13 = tpu.matmul %12, %10, %cst_11 {dimension_numbers = #tpu.dot_dimension_numbers<[1], [0], [0], [1], [0, 0, 1, 1], [], []>} : vector<64x64xbf16>, vector<64x512xbf16>, vector<64x512xf32> -> vector<64x512xf32>
    %c0_12 = arith.constant 0 : index
    %c0_13 = arith.constant 0 : index
    %c0_14 = arith.constant 0 : index
    %14 = vector.load %arg6[%c0_12, %c0_13, %c0_14] : memref<1x64x1xf32, #tpu.memory_space<vmem>>, vector<1x64x1xf32>
    %15 = vector.shape_cast %14 : vector<1x64x1xf32> to vector<64x1xf32>
    %16 = vector.broadcast %15 : vector<64x1xf32> to vector<64x512xf32>
    %17 = arith.addf %13, %16 : vector<64x512xf32>
    %cst_15 = arith.constant 0.000000e+00 : f32
    %18 = vector.broadcast %cst_15 : f32 to vector<64x512xf32>
    %19 = arith.maximumf %17, %18 : vector<64x512xf32>
    %c0_16 = arith.constant 0 : index
    %c0_17 = arith.constant 0 : index
    %20 = vector.load %arg7[%c0_16, %c0_17] : memref<64x512xf32, #tpu.memory_space<vmem>>, vector<64x512xf32>
    tpu.vector_store %arg7[%c0_16, %c0_17], %19 {strides = array<i32>} : memref<64x512xf32, #tpu.memory_space<vmem>>, vector<64x512xf32>,
    return
  }
  func.func @transform_0(%arg0: i32, %arg1: memref<5xi32, #tpu.memory_space<smem>>) -> (i32, i32) {
    %c0_i32 = arith.constant 0 : i32
    %c0_i32_0 = arith.constant 0 : i32
    return %c0_i32, %arg0 : i32, i32
  }
  func.func @transform_1(%arg0: i32, %arg1: memref<5xi32, #tpu.memory_space<smem>>) -> (i32, i32, i32) {
    %0 = arith.index_cast %arg0 : i32 to index
    %1 = memref.load %arg1[%0] : memref<5xi32, #tpu.memory_space<smem>>
    %c0_i32 = arith.constant 0 : i32
    %c0_i32_0 = arith.constant 0 : i32
    %c0_i32_1 = arith.constant 0 : i32
    return %1, %c0_i32, %c0_i32_0 : i32, i32, i32
  }
  func.func @transform_2(%arg0: i32, %arg1: memref<5xi32, #tpu.memory_space<smem>>) -> (i32, i32, i32) {
    %0 = arith.index_cast %arg0 : i32 to index
    %1 = memref.load %arg1[%0] : memref<5xi32, #tpu.memory_space<smem>>
    %c0_i32 = arith.constant 0 : i32
    %c0_i32_0 = arith.constant 0 : i32
    %c0_i32_1 = arith.constant 0 : i32
    return %1, %c0_i32, %c0_i32_0 : i32, i32, i32
  }
  func.func @transform_3(%arg0: i32, %arg1: memref<5xi32, #tpu.memory_space<smem>>) -> (i32, i32, i32) {
    %0 = arith.index_cast %arg0 : i32 to index
    %1 = memref.load %arg1[%0] : memref<5xi32, #tpu.memory_space<smem>>
    %c0_i32 = arith.constant 0 : i32
    %c0_i32_0 = arith.constant 0 : i32
    %c0_i32_1 = arith.constant 0 : i32
    return %1, %c0_i32, %c0_i32_0 : i32, i32, i32
  }
  func.func @transform_4(%arg0: i32, %arg1: memref<5xi32, #tpu.memory_space<smem>>) -> (i32, i32, i32) {
    %0 = arith.index_cast %arg0 : i32 to index
    %1 = memref.load %arg1[%0] : memref<5xi32, #tpu.memory_space<smem>>
    %c0_i32 = arith.constant 0 : i32
    %c0_i32_0 = arith.constant 0 : i32
    %c0_i32_1 = arith.constant 0 : i32
    return %1, %c0_i32, %c0_i32_0 : i32, i32, i32
  }
  func.func @transform_5(%arg0: i32, %arg1: memref<5xi32, #tpu.memory_space<smem>>) -> (i32, i32) {
    %c0_i32 = arith.constant 0 : i32
    %c0_i32_0 = arith.constant 0 : i32
    return %c0_i32, %arg0 : i32, i32
  }
}

</mosaic_0001>

<llo_original>
// kernel: poly_transform_forward.1
$region0: #{poly_transform_forward.1}
  #allocation0 [shape = 'u32[]', space=smem, size = 0x4, offset = 0x4, fixed_abs, tag = 'smem constant byte address 0x4 - core index']
  #allocation1 [shape = 'u32[144,128]{1,0:T(1,128)}', space=vmem, size = 0x12000, scoped, tag = 'internal scratch']
  #allocation2 [shape = 's32[1]{0}', space=sflag, size = 0x4, scoped, tag = 'scoped memory for poly_transform_forward.1']
  #allocation3 [shape = 'u8[512]{0}', space=smem, size = 0x200, scoped, tag = 'prefetched SMEM operand 0']
  %s0 = inlined_call_operand.vmem [shape: s32[5], index: 0, kind: input, shape index: {}]
  %s1 = inlined_call_operand.vmem [shape: bf16[256,2560], index: 1, kind: input, shape index: {}]
  %s2 = inlined_call_operand.vmem [shape: bf16[5,64,256], index: 2, kind: input, shape index: {}]
  %s3 = inlined_call_operand.vmem [shape: f32[5,64,1], index: 3, kind: input, shape index: {}]
  %s4 = inlined_call_operand.vmem [shape: bf16[5,64,64], index: 4, kind: input, shape index: {}]
  %s5 = inlined_call_operand.vmem [shape: f32[5,64,1], index: 5, kind: input, shape index: {}]
  %s6 = inlined_call_operand.vmem [shape: f32[64,2560], index: 6, kind: output, shape index: {}]
  %s7 = sld [smem:[#allocation0]]
  $region95: #{poly_transform_forward.1} parent=0
    _
  %s9 = ssub.s32 1, %s7
  %s10 = scalar_select 0, %s9, %s7
  %s11 = sshll.u32 %s0, 4
  %s12 = int_to_ptr.vmem [resolvable:$true] %s11
  %14 = dma.vmem_to_smem %s12, 16, [#allocation3], [#allocation2]
  %15 = dma.done [#allocation2], 16
  %16 = sfence
  $region1: #{poly_transform_forward.1} parent=0
    #allocation4 [shape = 'u8[524288]{0}', space=vmem, size = 0x80000, scoped, tag = 'input window, operand 1']
    #allocation5 [shape = 'u8[262144]{0}', space=vmem, size = 0x40000, scoped, tag = 'output window, operand 0']
    loop: start=0, step=1, limit=7
    $region2: #{poly_transform_forward.1} parent=1 // loop_pre_header
      _
    $region3: #{poly_transform_forward.1} parent=1 // loop_header
      %s18 = sphi 0, %s22
      %p19 = scmp.ge.s32.totalorder %s18, 7
      %s28 = sphi 0, %s30
      %s31 = sphi 0, %s28
      %s32 = sphi 0, %s31
      %s48 = sphi 0, %s32
      %s56 = sphi 0, %s58
      %s59 = sphi 0, %s56
      %s60 = sphi 0, %s59
      %s76 = sphi 0, %s60
      %s84 = sphi 0, %s86
      %s87 = sphi 0, %s84
      %s88 = sphi 0, %s87
      %s104 = sphi 0, %s88
      %s112 = sphi 0, %s114
      %s115 = sphi 0, %s112
      %s116 = sphi 0, %s115
      %s132 = sphi 0, %s116
      %s140 = sphi 0, %s142
      %s143 = sphi 0, %s140
      %s144 = sphi 0, %s143
      %s160 = sphi 0, %s144
      %s166 = sphi 0, %s168
      %s169 = sphi 0, %s166
      %s170 = sphi 0, %s169
      %s186 = sphi 0, %s170
    $region4: #{poly_transform_forward.1} parent=1 // loop_header_branch
      %21 = sbr.rel (%p19) target = $region8
    $region5: #{poly_transform_forward.1} parent=1 // loop_body
      %s23 = ssub.s32 %s18, 1
      %s24 = ssub.s32 %s18, 2
      %s25 = sadd.s32 %s18, 1
      %s26 = ssub.s32 %s18, %s25
      %p27 = scmp.eq.s32.totalorder %s26, 0
      %s29 = sadd.s32 %s28, 1
      %s30 = scalar_select %p27, %s28, %s29
      %p33 = pneg %p27
      %p34 = scmp.eq.s32.totalorder %s18, 4
      %p35 = por %p33, %p34
      %p36 = scmp.ne.s32.totalorder %s28, %s31
      %p37 = scmp.eq.s32.totalorder %s18, 0
      %p38 = por %p36, %p37
      %p39 = scmp.ne.s32.totalorder %s28, %s31
      %p40 = scmp.eq.s32.totalorder %s23, 4
      %p41 = por %p39, %p40
      %p42 = scmp.ne.s32.totalorder %s31, %s32
      %p43 = scmp.eq.s32.totalorder %s23, 0
      %p44 = por %p42, %p43
      %p45 = scmp.ne.s32.totalorder %s31, %s32
      %p46 = scmp.eq.s32.totalorder %s24, 4
      %p47 = por %p45, %p46
      %p49 = scmp.ne.s32.totalorder %s32, %s48
      %p50 = scmp.eq.s32.totalorder %s24, 0
      %p51 = por %p49, %p50
      %s52 = sld [smem:[#allocation3 + %s18]]
      %s53 = sld [smem:[#allocation3 + %s25]]
      %s54 = ssub.s32 %s52, %s53
      %p55 = scmp.eq.s32.totalorder %s54, 0
      %s57 = sadd.s32 %s56, 1
      %s58 = scalar_select %p55, %s56, %s57
      %p61 = pneg %p55
      %p62 = scmp.eq.s32.totalorder %s18, 4
      %p63 = por %p61, %p62
      %p64 = scmp.ne.s32.totalorder %s56, %s59
      %p65 = scmp.eq.s32.totalorder %s18, 0
      %p66 = por %p64, %p65
      %p67 = scmp.ne.s32.totalorder %s56, %s59
      %p68 = scmp.eq.s32.totalorder %s23, 4
      %p69 = por %p67, %p68
      %p70 = scmp.ne.s32.totalorder %s59, %s60
      %p71 = scmp.eq.s32.totalorder %s23, 0
      %p72 = por %p70, %p71
      %p73 = scmp.ne.s32.totalorder %s59, %s60
      %p74 = scmp.eq.s32.totalorder %s24, 4
      %p75 = por %p73, %p74
      %p77 = scmp.ne.s32.totalorder %s60, %s76
      %p78 = scmp.eq.s32.totalorder %s24, 0
      %p79 = por %p77, %p78
      %s80 = sld [smem:[#allocation3 + %s18]]
      %s81 = sld [smem:[#allocation3 + %s25]]
      %s82 = ssub.s32 %s80, %s81
      %p83 = scmp.eq.s32.totalorder %s82, 0
      %s85 = sadd.s32 %s84, 1
      %s86 = scalar_select %p83, %s84, %s85
      %p89 = pneg %p83
      %p90 = scmp.eq.s32.totalorder %s18, 4
      %p91 = por %p89, %p90
      %p92 = scmp.ne.s32.totalorder %s84, %s87
      %p93 = scmp.eq.s32.totalorder %s18, 0
      %p94 = por %p92, %p93
      %p95 = scmp.ne.s32.totalorder %s84, %s87
      %p96 = scmp.eq.s32.totalorder %s23, 4
      %p97 = por %p95, %p96
      %p98 = scmp.ne.s32.totalorder %s87, %s88
      %p99 = scmp.eq.s32.totalorder %s23, 0
      %p100 = por %p98, %p99
      %p101 = scmp.ne.s32.totalorder %s87, %s88
      %p102 = scmp.eq.s32.totalorder %s24, 4
      %p103 = por %p101, %p102
      %p105 = scmp.ne.s32.totalorder %s88, %s104
      %p106 = scmp.eq.s32.totalorder %s24, 0
      %p107 = por %p105, %p106
      %s108 = sld [smem:[#allocation3 + %s18]]
      %s109 = sld [smem:[#allocation3 + %s25]]
      %s110 = ssub.s32 %s108, %s109
      %p111 = scmp.eq.s32.totalorder %s110, 0
      %s113 = sadd.s32 %s112, 1
      %s114 = scalar_select %p111, %s112, %s113
      %p117 = pneg %p111
      %p118 = scmp.eq.s32.totalorder %s18, 4
      %p119 = por %p117, %p118
      %p120 = scmp.ne.s32.totalorder %s112, %s115
      %p121 = scmp.eq.s32.totalorder %s18, 0
      %p122 = por %p120, %p121
      %p123 = scmp.ne.s32.totalorder %s112, %s115
      %p124 = scmp.eq.s32.totalorder %s23, 4
      %p125 = por %p123, %p124
      %p126 = scmp.ne.s32.totalorder %s115, %s116
      %p127 = scmp.eq.s32.totalorder %s23, 0
      %p128 = por %p126, %p127
      %p129 = scmp.ne.s32.totalorder %s115, %s116
      %p130 = scmp.eq.s32.totalorder %s24, 4
      %p131 = por %p129, %p130
      %p133 = scmp.ne.s32.totalorder %s116, %s132
      %p134 = scmp.eq.s32.totalorder %s24, 0
      %p135 = por %p133, %p134
      %s136 = sld [smem:[#allocation3 + %s18]]
      %s137 = sld [smem:[#allocation3 + %s25]]
      %s138 = ssub.s32 %s136, %s137
      %p139 = scmp.eq.s32.totalorder %s138, 0
      %s141 = sadd.s32 %s140, 1
      %s142 = scalar_select %p139, %s140, %s141
      %p145 = pneg %p139
      %p146 = scmp.eq.s32.totalorder %s18, 4
      %p147 = por %p145, %p146
      %p148 = scmp.ne.s32.totalorder %s140, %s143
      %p149 = scmp.eq.s32.totalorder %s18, 0
      %p150 = por %p148, %p149
      %p151 = scmp.ne.s32.totalorder %s140, %s143
      %p152 = scmp.eq.s32.totalorder %s23, 4
      %p153 = por %p151, %p152
      %p154 = scmp.ne.s32.totalorder %s143, %s144
      %p155 = scmp.eq.s32.totalorder %s23, 0
      %p156 = por %p154, %p155
      %p157 = scmp.ne.s32.totalorder %s143, %s144
      %p158 = scmp.eq.s32.totalorder %s24, 4
      %p159 = por %p157, %p158
      %p161 = scmp.ne.s32.totalorder %s144, %s160
      %p162 = scmp.eq.s32.totalorder %s24, 0
      %p163 = por %p161, %p162
      %s164 = ssub.s32 %s18, %s25
      %p165 = scmp.eq.s32.totalorder %s164, 0
      %s167 = sadd.s32 %s166, 1
      %s168 = scalar_select %p165, %s166, %s167
      %p171 = pneg %p165
      %p172 = scmp.eq.s32.totalorder %s18, 4
      %p173 = por %p171, %p172
      %p174 = scmp.ne.s32.totalorder %s166, %s169
      %p175 = scmp.eq.s32.totalorder %s18, 0
      %p176 = por %p174, %p175
      %p177 = scmp.ne.s32.totalorder %s166, %s169
      %p178 = scmp.eq.s32.totalorder %s23, 4
      %p179 = por %p177, %p178
      %p180 = scmp.ne.s32.totalorder %s169, %s170
      %p181 = scmp.eq.s32.totalorder %s23, 0
      %p182 = por %p180, %p181
      %p183 = scmp.ne.s32.totalorder %s169, %s170
      %p184 = scmp.eq.s32.totalorder %s24, 4
      %p185 = por %p183, %p184
      %p187 = scmp.ne.s32.totalorder %s170, %s186
      %p188 = scmp.eq.s32.totalorder %s24, 0
      %p189 = por %p187, %p188
      %p190 = scmp.le.s32.totalorder 1, %s18
      %p191 = scmp.lt.s32.totalorder %s18, 6
      %p192 = pnand %p190, %p191
      %p193 = pneg %p192
      // Predicated region
      $region9: #{poly_transform_forward.1} parent=5 // pred_check
        _
      $region10: #{poly_transform_forward.1} parent=5 // pred_check_branch
        %195 = sbr.rel (%p192) target = $region12
      $region11: #{poly_transform_forward.1} parent=5 // pred_region
        %s196 = ssub.s32 %s18, 1
      $region12: #{poly_transform_forward.1} parent=5 // pred_fallthru
        _
      %p197 = scmp.lt.s32.totalorder %s18, 5
      // Predicated region
      $region13: #{poly_transform_forward.1} parent=5 // pred_check
        %p198 = pneg %p197
      $region14: #{poly_transform_forward.1} parent=5 // pred_check_branch
        %200 = sbr.rel (%p198) target = $region16
      $region15: #{poly_transform_forward.1} parent=5 // pred_region
        // Predicated region
        $region17: #{poly_transform_forward.1} parent=15 // pred_check
          %p201 = pneg %p38
        $region18: #{poly_transform_forward.1} parent=15 // pred_check_branch
          %203 = sbr.rel (%p201) target = $region20
        $region19: #{poly_transform_forward.1} parent=15 // pred_region
          %s204 = sand.u32 %s28, 1
          %s205 = sand.u32 %s28, 1
          %s206 = smul.addr %s205, 512
          %s207 = scalar_lea.vmem [#allocation4], %s206
          %s208 = smul.u32 4, %s18
          %s209 = smul.addr %s208, 4
          %s210 = scalar_lea.vmem %s1, %s209
          // Predicated region
          $region21: #{poly_transform_forward.1} parent=19 // pred_check
            _
          $region22: #{poly_transform_forward.1} parent=19 // pred_check_branch
            %212 = sbr.rel (0) target = $region24
          $region23: #{poly_transform_forward.1} parent=19 // pred_region
            // Predicated region
            $region25: #{poly_transform_forward.1} parent=23 // pred_check
              _
            $region26: #{poly_transform_forward.1} parent=23 // pred_check_branch
              %214 = sbr.rel (0) target = $region28
            $region27: #{poly_transform_forward.1} parent=23 // pred_region
              loop: start=0, step=1, limit=1
              $region29: #{poly_transform_forward.1} parent=27 // loop_pre_header
                _
              $region30: #{poly_transform_forward.1} parent=27 // loop_header
                %s216 = sphi 0, %s220
                %p217 = scmp.ge.s32.totalorder %s216, 1
                %s221 = sphi %s210, %s210
                %s222 = sphi %s207, %s207
              $region31: #{poly_transform_forward.1} parent=27 // loop_header_branch
                %219 = sbr.rel (%p217) target = $region35
              $region32: #{poly_transform_forward.1} parent=27 // loop_body
                %v223 = vld [vmem:[%s221] sm:$0xff]
                %224 = vst [vmem:[%s222] sm:$0xff] %v223
                %v225 = vld [vmem:[%s221 + $0x8] sm:$0xff]
                %226 = vst [vmem:[%s222 + $0x8] sm:$0xff] %v225
                %v227 = vld [vmem:[%s221 + $0x50] sm:$0xff]
                %228 = vst [vmem:[%s222 + $0x10] sm:$0xff] %v227
                %v229 = vld [vmem:[%s221 + $0x58] sm:$0xff]
                %230 = vst [vmem:[%s222 + $0x18] sm:$0xff] %v229
                %v231 = vld [vmem:[%s221 + $0xa0] sm:$0xff]
                %232 = vst [vmem:[%s222 + $0x20] sm:$0xff] %v231
                %v233 = vld [vmem:[%s221 + $0xa8] sm:$0xff]
                %234 = vst [vmem:[%s222 + $0x28] sm:$0xff] %v233
                %v235 = vld [vmem:[%s221 + $0xf0] sm:$0xff]
                %236 = vst [vmem:[%s222 + $0x30] sm:$0xff] %v235
                %v237 = vld [vmem:[%s221 + $0xf8] sm:$0xff]
                %238 = vst [vmem:[%s222 + $0x38] sm:$0xff] %v237
                %v239 = vld [vmem:[%s221 + $0x140] sm:$0xff]
                %240 = vst [vmem:[%s222 + $0x40] sm:$0xff] %v239
                %v241 = vld [vmem:[%s221 + $0x148] sm:$0xff]
                %242 = vst [vmem:[%s222 + $0x48] sm:$0xff] %v241
                %v243 = vld [vmem:[%s221 + $0x190] sm:$0xff]
                %244 = vst [vmem:[%s222 + $0x50] sm:$0xff] %v243
                %v245 = vld [vmem:[%s221 + $0x198] sm:$0xff]
                %246 = vst [vmem:[%s222 + $0x58] sm:$0xff] %v245
                %v247 = vld [vmem:[%s221 + $0x1e0] sm:$0xff]
                %248 = vst [vmem:[%s222 + $0x60] sm:$0xff] %v247
                %v249 = vld [vmem:[%s221 + $0x1e8] sm:$0xff]
                %250 = vst [vmem:[%s222 + $0x68] sm:$0xff] %v249
                %v251 = vld [vmem:[%s221 + $0x230] sm:$0xff]
                %252 = vst [vmem:[%s222 + $0x70] sm:$0xff] %v251
                %v253 = vld [vmem:[%s221 + $0x238] sm:$0xff]
                %254 = vst [vmem:[%s222 + $0x78] sm:$0xff] %v253
                %v255 = vld [vmem:[%s221 + $0x280] sm:$0xff]
                %256 = vst [vmem:[%s222 + $0x80] sm:$0xff] %v255
                %v257 = vld [vmem:[%s221 + $0x288] sm:$0xff]
                %258 = vst [vmem:[%s222 + $0x88] sm:$0xff] %v257
                %v259 = vld [vmem:[%s221 + $0x2d0] sm:$0xff]
                %260 = vst [vmem:[%s222 + $0x90] sm:$0xff] %v259
                %v261 = vld [vmem:[%s221 + $0x2d8] sm:$0xff]
                %262 = vst [vmem:[%s222 + $0x98] sm:$0xff] %v261
                %v263 = vld [vmem:[%s221 + $0x320] sm:$0xff]
                %264 = vst [vmem:[%s222 + $0xa0] sm:$0xff] %v263
                %v265 = vld [vmem:[%s221 + $0x328] sm:$0xff]
                %266 = vst [vmem:[%s222 + $0xa8] sm:$0xff] %v265
                %v267 = vld [vmem:[%s221 + $0x370] sm:$0xff]
                %268 = vst [vmem:[%s222 + $0xb0] sm:$0xff] %v267
                %v269 = vld [vmem:[%s221 + $0x378] sm:$0xff]
                %270 = vst [vmem:[%s222 + $0xb8] sm:$0xff] %v269
                %v271 = vld [vmem:[%s221 + $0x3c0] sm:$0xff]
                %272 = vst [vmem:[%s222 + $0xc0] sm:$0xff] %v271
                %v273 = vld [vmem:[%s221 + $0x3c8] sm:$0xff]
                %274 = vst [vmem:[%s222 + $0xc8] sm:$0xff] %v273
                %v275 = vld [vmem:[%s221 + $0x410] sm:$0xff]
                %276 = vst [vmem:[%s222 + $0xd0] sm:$0xff] %v275
                %v277 = vld [vmem:[%s221 + $0x418] sm:$0xff]
                %278 = vst [vmem:[%s222 + $0xd8] sm:$0xff] %v277
                %v279 = vld [vmem:[%s221 + $0x460] sm:$0xff]
                %280 = vst [vmem:[%s222 + $0xe0] sm:$0xff] %v279
                %v281 = vld [vmem:[%s221 + $0x468] sm:$0xff]
                %282 = vst [vmem:[%s222 + $0xe8] sm:$0xff] %v281
                %v283 = vld [vmem:[%s221 + $0x4b0] sm:$0xff]
                %284 = vst [vmem:[%s222 + $0xf0] sm:$0xff] %v283
                %v285 = vld [vmem:[%s221 + $0x4b8] sm:$0xff]
                %286 = vst [vmem:[%s222 + $0xf8] sm:$0xff] %v285
                %v287 = vld [vmem:[%s221 + $0x500] sm:$0xff]
                %288 = vst [vmem:[%s222 + $0x100] sm:$0xff] %v287
                %v289 = vld [vmem:[%s221 + $0x508] sm:$0xff]
                %290 = vst [vmem:[%s222 + $0x108] sm:$0xff] %v289
                %v291 = vld [vmem:[%s221 + $0x550] sm:$0xff]
                %292 = vst [vmem:[%s222 + $0x110] sm:$0xff] %v291
                %v293 = vld [vmem:[%s221 + $0x558] sm:$0xff]
                %294 = vst [vmem:[%s222 + $0x118] sm:$0xff] %v293
                %v295 = vld [vmem:[%s221 + $0x5a0] sm:$0xff]
                %296 = vst [vmem:[%s222 + $0x120] sm:$0xff] %v295
                %v297 = vld [vmem:[%s221 + $0x5a8] sm:$0xff]
                %298 = vst [vmem:[%s222 + $0x128] sm:$0xff] %v297
                %v299 = vld [vmem:[%s221 + $0x5f0] sm:$0xff]
                %300 = vst [vmem:[%s222 + $0x130] sm:$0xff] %v299
                %v301 = vld [vmem:[%s221 + $0x5f8] sm:$0xff]
                %302 = vst [vmem:[%s222 + $0x138] sm:$0xff] %v301
                %v303 = vld [vmem:[%s221 + $0x640] sm:$0xff]
                %304 = vst [vmem:[%s222 + $0x140] sm:$0xff] %v303
                %v305 = vld [vmem:[%s221 + $0x648] sm:$0xff]
                %306 = vst [vmem:[%s222 + $0x148] sm:$0xff] %v305
                %v307 = vld [vmem:[%s221 + $0x690] sm:$0xff]
                %308 = vst [vmem:[%s222 + $0x150] sm:$0xff] %v307
                %v309 = vld [vmem:[%s221 + $0x698] sm:$0xff]
                %310 = vst [vmem:[%s222 + $0x158] sm:$0xff] %v309
                %v311 = vld [vmem:[%s221 + $0x6e0] sm:$0xff]
                %312 = vst [vmem:[%s222 + $0x160] sm:$0xff] %v311
                %v313 = vld [vmem:[%s221 + $0x6e8] sm:$0xff]
                %314 = vst [vmem:[%s222 + $0x168] sm:$0xff] %v313
                %v315 = vld [vmem:[%s221 + $0x730] sm:$0xff]
                %316 = vst [vmem:[%s222 + $0x170] sm:$0xff] %v315
                %v317 = vld [vmem:[%s221 + $0x738] sm:$0xff]
                %318 = vst [vmem:[%s222 + $0x178] sm:$0xff] %v317
                %v319 = vld [vmem:[%s221 + $0x780] sm:$0xff]
                %320 = vst [vmem:[%s222 + $0x180] sm:$0xff] %v319
                %v321 = vld [vmem:[%s221 + $0x788] sm:$0xff]
                %322 = vst [vmem:[%s222 + $0x188] sm:$0xff] %v321
                %v323 = vld [vmem:[%s221 + $0x7d0] sm:$0xff]
                %324 = vst [vmem:[%s222 + $0x190] sm:$0xff] %v323
                %v325 = vld [vmem:[%s221 + $0x7d8] sm:$0xff]
                %326 = vst [vmem:[%s222 + $0x198] sm:$0xff] %v325
                %v327 = vld [vmem:[%s221 + $0x820] sm:$0xff]
                %328 = vst [vmem:[%s222 + $0x1a0] sm:$0xff] %v327
                %v329 = vld [vmem:[%s221 + $0x828] sm:$0xff]
                %330 = vst [vmem:[%s222 + $0x1a8] sm:$0xff] %v329
                %v331 = vld [vmem:[%s221 + $0x870] sm:$0xff]
                %332 = vst [vmem:[%s222 + $0x1b0] sm:$0xff] %v331
                %v333 = vld [vmem:[%s221 + $0x878] sm:$0xff]
                %334 = vst [vmem:[%s222 + $0x1b8] sm:$0xff] %v333
                %v335 = vld [vmem:[%s221 + $0x8c0] sm:$0xff]
                %336 = vst [vmem:[%s222 + $0x1c0] sm:$0xff] %v335
                %v337 = vld [vmem:[%s221 + $0x8c8] sm:$0xff]
                %338 = vst [vmem:[%s222 + $0x1c8] sm:$0xff] %v337
                %v339 = vld [vmem:[%s221 + $0x910] sm:$0xff]
                %340 = vst [vmem:[%s222 + $0x1d0] sm:$0xff] %v339
                %v341 = vld [vmem:[%s221 + $0x918] sm:$0xff]
                %342 = vst [vmem:[%s222 + $0x1d8] sm:$0xff] %v341
                %v343 = vld [vmem:[%s221 + $0x960] sm:$0xff]
                %344 = vst [vmem:[%s222 + $0x1e0] sm:$0xff] %v343
                %v345 = vld [vmem:[%s221 + $0x968] sm:$0xff]
                %346 = vst [vmem:[%s222 + $0x1e8] sm:$0xff] %v345
                %v347 = vld [vmem:[%s221 + $0x9b0] sm:$0xff]
                %348 = vst [vmem:[%s222 + $0x1f0] sm:$0xff] %v347
                %v349 = vld [vmem:[%s221 + $0x9b8] sm:$0xff]
                %350 = vst [vmem:[%s222 + $0x1f8] sm:$0xff] %v349
              $region33: #{poly_transform_forward.1} parent=27 // loop_footer
                %s220 = sadd.s32 1, %s216
              $region34: #{poly_transform_forward.1} parent=27 // loop_footer_branch
                %215 = sbr.rel target = $region30
              $region35: #{poly_transform_forward.1} parent=27 // loop_exit
                _
            $region28: #{poly_transform_forward.1} parent=23 // pred_fallthru
              _
            // Predicated region
            $region36: #{poly_transform_forward.1} parent=23 // pred_check
              _
            $region37: #{poly_transform_forward.1} parent=23 // pred_check_branch
              %352 = sbr.rel target = $region39
            $region38: #{poly_transform_forward.1} parent=23 // pred_region
              _
            $region39: #{poly_transform_forward.1} parent=23 // pred_fallthru
              _
          $region24: #{poly_transform_forward.1} parent=19 // pred_fallthru
            _
          %353 = vnop
        $region20: #{poly_transform_forward.1} parent=15 // pred_fallthru
          _
        // Predicated region
        $region40: #{poly_transform_forward.1} parent=15 // pred_check
          %p354 = pneg %p66
        $region41: #{poly_transform_forward.1} parent=15 // pred_check_branch
          %356 = sbr.rel (%p354) target = $region43
        $region42: #{poly_transform_forward.1} parent=15 // pred_region
          %s357 = sld [smem:[#allocation3 + %s18]]
          %p358 = scmp.lt.s32.totalorder %s357, 4
          %s359 = scalar_select %p358, %s357, 4
          %s360 = smul.addr %s359, 16
          %s361 = smul.addr %s360, 4
          %s362 = scalar_lea.vmem %s2, %s361
          %s363 = sld [smem:[#allocation3 + %s18]]
        $region43: #{poly_transform_forward.1} parent=15 // pred_fallthru
          _
        // Predicated region
        $region44: #{poly_transform_forward.1} parent=15 // pred_check
          %p364 = pneg %p94
        $region45: #{poly_transform_forward.1} parent=15 // pred_check_branch
          %366 = sbr.rel (%p364) target = $region47
        $region46: #{poly_transform_forward.1} parent=15 // pred_region
          %s367 = sld [smem:[#allocation3 + %s18]]
          %p368 = scmp.lt.s32.totalorder %s367, 4
          %s369 = scalar_select %p368, %s367, 4
          %s370 = smul.addr %s369, 8
          %s371 = smul.addr %s370, 8
          %s372 = scalar_lea.vmem %s3, %s371
          %s373 = sld [smem:[#allocation3 + %s18]]
        $region47: #{poly_transform_forward.1} parent=15 // pred_fallthru
          _
        // Predicated region
        $region48: #{poly_transform_forward.1} parent=15 // pred_check
          %p374 = pneg %p122
        $region49: #{poly_transform_forward.1} parent=15 // pred_check_branch
          %376 = sbr.rel (%p374) target = $region51
        $region50: #{poly_transform_forward.1} parent=15 // pred_region
          %s377 = sld [smem:[#allocation3 + %s18]]
          %p378 = scmp.lt.s32.totalorder %s377, 4
          %s379 = scalar_select %p378, %s377, 4
          %s380 = smul.addr %s379, 8
          %s381 = smul.addr %s380, 4
          %s382 = scalar_lea.vmem %s4, %s381
          %s383 = sld [smem:[#allocation3 + %s18]]
        $region51: #{poly_transform_forward.1} parent=15 // pred_fallthru
          _
        // Predicated region
        $region52: #{poly_transform_forward.1} parent=15 // pred_check
          %p384 = pneg %p150
        $region53: #{poly_transform_forward.1} parent=15 // pred_check_branch
          %386 = sbr.rel (%p384) target = $region55
        $region54: #{poly_transform_forward.1} parent=15 // pred_region
          %s387 = sld [smem:[#allocation3 + %s18]]
          %p388 = scmp.lt.s32.totalorder %s387, 4
          %s389 = scalar_select %p388, %s387, 4
          %s390 = smul.addr %s389, 8
          %s391 = smul.addr %s390, 8
          %s392 = scalar_lea.vmem %s5, %s391
          %s393 = sld [smem:[#allocation3 + %s18]]
        $region55: #{poly_transform_forward.1} parent=15 // pred_fallthru
          _
      $region16: #{poly_transform_forward.1} parent=5 // pred_fallthru
        _
      %p394 = scmp.le.s32.totalorder 1, %s18
      %p395 = scmp.lt.s32.totalorder %s18, 6
      %p396 = pnand %p394, %p395
      %p397 = pneg %p396
      // Predicated region
      $region56: #{poly_transform_forward.1} parent=5 // pred_check
        _
      $region57: #{poly_transform_forward.1} parent=5 // pred_check_branch
        %399 = sbr.rel (%p396) target = $region59
      $region58: #{poly_transform_forward.1} parent=5 // pred_region
        %s400 = ssub.s32 %s18, 1
        %s401 = sand.u32 %s31, 1
        %s402 = sand.u32 %s31, 1
        %s403 = smul.addr %s402, 512
        %s404 = scalar_lea.vmem [#allocation4], %s403
        // Predicated region
        $region60: #{poly_transform_forward.1} parent=58 // pred_check
          %p405 = pneg %p44
        $region61: #{poly_transform_forward.1} parent=58 // pred_check_branch
          %407 = sbr.rel (%p405) target = $region63
        $region62: #{poly_transform_forward.1} parent=58 // pred_region
          _
        $region63: #{poly_transform_forward.1} parent=58 // pred_fallthru
          _
        %s408 = sand.u32 %s31, 1
        %s409 = sand.u32 %s31, 1
        %s410 = smul.addr %s409, 512
        %s411 = scalar_lea.vmem [#allocation4], %s410
        %p412 = pneg %p44
        %p413 = pneg %p41
        %s414 = sld [smem:[#allocation3 + %s23]]
        %p415 = scmp.lt.s32.totalorder %s414, 4
        %s416 = scalar_select %p415, %s414, 4
        %s417 = smul.addr %s416, 16
        %s418 = smul.addr %s417, 4
        %s419 = scalar_lea.vmem %s2, %s418
        %p420 = pneg %p72
        %p421 = pneg %p69
        %s422 = sld [smem:[#allocation3 + %s23]]
        %p423 = scmp.lt.s32.totalorder %s422, 4
        %s424 = scalar_select %p423, %s422, 4
        %s425 = smul.addr %s424, 8
        %s426 = smul.addr %s425, 8
        %s427 = scalar_lea.vmem %s3, %s426
        %p428 = pneg %p100
        %p429 = pneg %p97
        %s430 = sld [smem:[#allocation3 + %s23]]
        %p431 = scmp.lt.s32.totalorder %s430, 4
        %s432 = scalar_select %p431, %s430, 4
        %s433 = smul.addr %s432, 8
        %s434 = smul.addr %s433, 4
        %s435 = scalar_lea.vmem %s4, %s434
        %p436 = pneg %p128
        %p437 = pneg %p125
        %s438 = sld [smem:[#allocation3 + %s23]]
        %p439 = scmp.lt.s32.totalorder %s438, 4
        %s440 = scalar_select %p439, %s438, 4
        %s441 = smul.addr %s440, 8
        %s442 = smul.addr %s441, 8
        %s443 = scalar_lea.vmem %s5, %s442
        %p444 = pneg %p156
        %p445 = pneg %p153
        %p446 = pneg %p182
        %p447 = pneg %p179
        %s448 = sand.u32 %s169, 1
        %s449 = sand.u32 %s169, 1
        %s450 = smul.addr %s449, 256
        %s451 = scalar_lea.vmem [#allocation5], %s450
        %s452 = smul.u32 4, %s23
        %s453 = sld [smem:[#allocation3 + %s23]]
        %p454 = scmp.lt.s32.totalorder %s453, 4
        %s455 = scalar_select %p454, %s453, 4
        %s456 = smul.addr %s455, 16
        %s457 = smul.addr %s456, 4
        %s458 = scalar_lea.vmem %s2, %s457
        %s459 = sld [smem:[#allocation3 + %s23]]
        %s460 = sld [smem:[#allocation3 + %s23]]
        %p461 = scmp.lt.s32.totalorder %s460, 4
        %s462 = scalar_select %p461, %s460, 4
        %s463 = smul.addr %s462, 8
        %s464 = smul.addr %s463, 8
        %s465 = scalar_lea.vmem %s3, %s464
        %s466 = sld [smem:[#allocation3 + %s23]]
        %s467 = sld [smem:[#allocation3 + %s23]]
        %p468 = scmp.lt.s32.totalorder %s467, 4
        %s469 = scalar_select %p468, %s467, 4
        %s470 = smul.addr %s469, 8
        %s471 = smul.addr %s470, 4
        %s472 = scalar_lea.vmem %s4, %s471
        %s473 = sld [smem:[#allocation3 + %s23]]
        %s474 = sld [smem:[#allocation3 + %s23]]
        %p475 = scmp.lt.s32.totalorder %s474, 4
        %s476 = scalar_select %p475, %s474, 4
        %s477 = smul.addr %s476, 8
        %s478 = smul.addr %s477, 8
        %s479 = scalar_lea.vmem %s5, %s478
        %s480 = sld [smem:[#allocation3 + %s23]]
        %s481 = smul.u32 4, %s23
        %v483 = vld [vmem:[%s404] sm:$0xff]
        %v484 = vld [vmem:[%s404 + $0x8] sm:$0xff]
        %v485 = vld [vmem:[%s404 + $0x10] sm:$0xff]
        %v486 = vld [vmem:[%s404 + $0x18] sm:$0xff]
        %v487 = vld [vmem:[%s404 + $0x20] sm:$0xff]
        %v488 = vld [vmem:[%s404 + $0x28] sm:$0xff]
        %v489 = vld [vmem:[%s404 + $0x30] sm:$0xff]
        %v490 = vld [vmem:[%s404 + $0x38] sm:$0xff]
        %v491 = vld [vmem:[%s404 + $0x40] sm:$0xff]
        %v492 = vld [vmem:[%s404 + $0x48] sm:$0xff]
        %v493 = vld [vmem:[%s404 + $0x50] sm:$0xff]
        %v494 = vld [vmem:[%s404 + $0x58] sm:$0xff]
        %v495 = vld [vmem:[%s404 + $0x60] sm:$0xff]
        %v496 = vld [vmem:[%s404 + $0x68] sm:$0xff]
        %v497 = vld [vmem:[%s404 + $0x70] sm:$0xff]
        %v498 = vld [vmem:[%s404 + $0x78] sm:$0xff]
        %v499 = vld [vmem:[%s404 + $0x80] sm:$0xff]
        %v500 = vld [vmem:[%s404 + $0x88] sm:$0xff]
        %v501 = vld [vmem:[%s404 + $0x90] sm:$0xff]
        %v502 = vld [vmem:[%s404 + $0x98] sm:$0xff]
        %v503 = vld [vmem:[%s404 + $0xa0] sm:$0xff]
        %v504 = vld [vmem:[%s404 + $0xa8] sm:$0xff]
        %v505 = vld [vmem:[%s404 + $0xb0] sm:$0xff]
        %v506 = vld [vmem:[%s404 + $0xb8] sm:$0xff]
        %v507 = vld [vmem:[%s404 + $0xc0] sm:$0xff]
        %v508 = vld [vmem:[%s404 + $0xc8] sm:$0xff]
        %v509 = vld [vmem:[%s404 + $0xd0] sm:$0xff]
        %v510 = vld [vmem:[%s404 + $0xd8] sm:$0xff]
        %v511 = vld [vmem:[%s404 + $0xe0] sm:$0xff]
        %v512 = vld [vmem:[%s404 + $0xe8] sm:$0xff]
        %v513 = vld [vmem:[%s404 + $0xf0] sm:$0xff]
        %v514 = vld [vmem:[%s404 + $0xf8] sm:$0xff]
        %v515 = vld [vmem:[%s404 + $0x100] sm:$0xff]
        %v516 = vld [vmem:[%s404 + $0x108] sm:$0xff]
        %v517 = vld [vmem:[%s404 + $0x110] sm:$0xff]
        %v518 = vld [vmem:[%s404 + $0x118] sm:$0xff]
        %v519 = vld [vmem:[%s404 + $0x120] sm:$0xff]
        %v520 = vld [vmem:[%s404 + $0x128] sm:$0xff]
        %v521 = vld [vmem:[%s404 + $0x130] sm:$0xff]
        %v522 = vld [vmem:[%s404 + $0x138] sm:$0xff]
        %v523 = vld [vmem:[%s404 + $0x140] sm:$0xff]
        %v524 = vld [vmem:[%s404 + $0x148] sm:$0xff]
        %v525 = vld [vmem:[%s404 + $0x150] sm:$0xff]
        %v526 = vld [vmem:[%s404 + $0x158] sm:$0xff]
        %v527 = vld [vmem:[%s404 + $0x160] sm:$0xff]
        %v528 = vld [vmem:[%s404 + $0x168] sm:$0xff]
        %v529 = vld [vmem:[%s404 + $0x170] sm:$0xff]
        %v530 = vld [vmem:[%s404 + $0x178] sm:$0xff]
        %v531 = vld [vmem:[%s404 + $0x180] sm:$0xff]
        %v532 = vld [vmem:[%s404 + $0x188] sm:$0xff]
        %v533 = vld [vmem:[%s404 + $0x190] sm:$0xff]
        %v534 = vld [vmem:[%s404 + $0x198] sm:$0xff]
        %v535 = vld [vmem:[%s404 + $0x1a0] sm:$0xff]
        %v536 = vld [vmem:[%s404 + $0x1a8] sm:$0xff]
        %v537 = vld [vmem:[%s404 + $0x1b0] sm:$0xff]
        %v538 = vld [vmem:[%s404 + $0x1b8] sm:$0xff]
        %v539 = vld [vmem:[%s404 + $0x1c0] sm:$0xff]
        %v540 = vld [vmem:[%s404 + $0x1c8] sm:$0xff]
        %v541 = vld [vmem:[%s404 + $0x1d0] sm:$0xff]
        %v542 = vld [vmem:[%s404 + $0x1d8] sm:$0xff]
        %v543 = vld [vmem:[%s404 + $0x1e0] sm:$0xff]
        %v544 = vld [vmem:[%s404 + $0x1e8] sm:$0xff]
        %v545 = vld [vmem:[%s404 + $0x1f0] sm:$0xff]
        %v546 = vld [vmem:[%s404 + $0x1f8] sm:$0xff]
        %v547 = vld [vmem:[%s458] sm:$0xff]
        %v548 = vld [vmem:[%s458 + $0x8] sm:$0xff]
        %v549 = vld [vmem:[%s458 + $0x10] sm:$0xff]
        %v550 = vld [vmem:[%s458 + $0x18] sm:$0xff]
        %v551 = vld [vmem:[%s458 + $0x20] sm:$0xff]
        %v552 = vld [vmem:[%s458 + $0x28] sm:$0xff]
        %v553 = vld [vmem:[%s458 + $0x30] sm:$0xff]
        %v554 = vld [vmem:[%s458 + $0x38] sm:$0xff]
        %v555 = vld [vmem:[%s465] sm:$0xff]
        %v556 = vld [vmem:[%s465 + $0x8] sm:$0xff]
        %v557 = vld [vmem:[%s465 + $0x10] sm:$0xff]
        %v558 = vld [vmem:[%s465 + $0x18] sm:$0xff]
        %v559 = vld [vmem:[%s465 + $0x20] sm:$0xff]
        %v560 = vld [vmem:[%s465 + $0x28] sm:$0xff]
        %v561 = vld [vmem:[%s465 + $0x30] sm:$0xff]
        %v562 = vld [vmem:[%s465 + $0x38] sm:$0xff]
        %564 = vset.pattern.permute.xlu0 0
        %565 = vperm.xlu0 %564, %v555
        %v566 = vpop.permute.xlu0 %565
        %569 = vset.pattern.permute.xlu0 0
        %570 = vperm.xlu0 %569, %v556
        %v571 = vpop.permute.xlu0 %570
        %574 = vset.pattern.permute.xlu0 0
        %575 = vperm.xlu0 %574, %v557
        %v576 = vpop.permute.xlu0 %575
        %579 = vset.pattern.permute.xlu0 0
        %580 = vperm.xlu0 %579, %v558
        %v581 = vpop.permute.xlu0 %580
        %584 = vset.pattern.permute.xlu0 0
        %585 = vperm.xlu0 %584, %v559
        %v586 = vpop.permute.xlu0 %585
        %589 = vset.pattern.permute.xlu0 0
        %590 = vperm.xlu0 %589, %v560
        %v591 = vpop.permute.xlu0 %590
        %594 = vset.pattern.permute.xlu0 0
        %595 = vperm.xlu0 %594, %v561
        %v596 = vpop.permute.xlu0 %595
        %599 = vset.pattern.permute.xlu0 0
        %600 = vperm.xlu0 %599, %v562
        %v601 = vpop.permute.xlu0 %600
        %v611 = vunpack.c.l.b16 %v547
        %v612 = vunpack.c.h.b16 %v547
        %v613 = vunpack.c.l.b16 %v548
        %v614 = vunpack.c.h.b16 %v548
        %v615 = vunpack.c.l.b16 %v549
        %v616 = vunpack.c.h.b16 %v549
        %v617 = vunpack.c.l.b16 %v550
        %v618 = vunpack.c.h.b16 %v550
        %v619 = vunpack.c.l.b16 %v551
        %v620 = vunpack.c.h.b16 %v551
        %v621 = vunpack.c.l.b16 %v552
        %v622 = vunpack.c.h.b16 %v552
        %v623 = vunpack.c.l.b16 %v553
        %v624 = vunpack.c.h.b16 %v553
        %v625 = vunpack.c.l.b16 %v554
        %v626 = vunpack.c.h.b16 %v554
        %v627 = vpack.c.b16 %v613, %v611
        %v628 = vpack.c.b16 %v614, %v612
        %v629 = vpack.c.b16 %v617, %v615
        %v630 = vpack.c.b16 %v618, %v616
        %v631 = vpack.c.b16 %v621, %v619
        %v632 = vpack.c.b16 %v622, %v620
        %v633 = vpack.c.b16 %v625, %v623
        %v634 = vpack.c.b16 %v626, %v624
        %v707 = vunpack.c.l.b16 %v483
        %v708 = vunpack.c.h.b16 %v483
        %v709 = vunpack.c.l.b16 %v484
        %v710 = vunpack.c.h.b16 %v484
        %v711 = vunpack.c.l.b16 %v485
        %v712 = vunpack.c.h.b16 %v485
        %v713 = vunpack.c.l.b16 %v486
        %v714 = vunpack.c.h.b16 %v486
        %v715 = vunpack.c.l.b16 %v487
        %v716 = vunpack.c.h.b16 %v487
        %v717 = vunpack.c.l.b16 %v488
        %v718 = vunpack.c.h.b16 %v488
        %v719 = vunpack.c.l.b16 %v489
        %v720 = vunpack.c.h.b16 %v489
        %v721 = vunpack.c.l.b16 %v490
        %v722 = vunpack.c.h.b16 %v490
        %v723 = vunpack.c.l.b16 %v491
        %v724 = vunpack.c.h.b16 %v491
        %v725 = vunpack.c.l.b16 %v492
        %v726 = vunpack.c.h.b16 %v492
        %v727 = vunpack.c.l.b16 %v493
        %v728 = vunpack.c.h.b16 %v493
        %v729 = vunpack.c.l.b16 %v494
        %v730 = vunpack.c.h.b16 %v494
        %v731 = vunpack.c.l.b16 %v495
        %v732 = vunpack.c.h.b16 %v495
        %v733 = vunpack.c.l.b16 %v496
        %v734 = vunpack.c.h.b16 %v496
        %v735 = vunpack.c.l.b16 %v497
        %v736 = vunpack.c.h.b16 %v497
        %v737 = vunpack.c.l.b16 %v498
        %v738 = vunpack.c.h.b16 %v498
        %v739 = vunpack.c.l.b16 %v499
        %v740 = vunpack.c.h.b16 %v499
        %v741 = vunpack.c.l.b16 %v500
        %v742 = vunpack.c.h.b16 %v500
        %v743 = vunpack.c.l.b16 %v501
        %v744 = vunpack.c.h.b16 %v501
        %v745 = vunpack.c.l.b16 %v502
        %v746 = vunpack.c.h.b16 %v502
        %v747 = vunpack.c.l.b16 %v503
        %v748 = vunpack.c.h.b16 %v503
        %v749 = vunpack.c.l.b16 %v504
        %v750 = vunpack.c.h.b16 %v504
        %v751 = vunpack.c.l.b16 %v505
        %v752 = vunpack.c.h.b16 %v505
        %v753 = vunpack.c.l.b16 %v506
        %v754 = vunpack.c.h.b16 %v506
        %v755 = vunpack.c.l.b16 %v507
        %v756 = vunpack.c.h.b16 %v507
        %v757 = vunpack.c.l.b16 %v508
        %v758 = vunpack.c.h.b16 %v508
        %v759 = vunpack.c.l.b16 %v509
        %v760 = vunpack.c.h.b16 %v509
        %v761 = vunpack.c.l.b16 %v510
        %v762 = vunpack.c.h.b16 %v510
        %v763 = vunpack.c.l.b16 %v511
        %v764 = vunpack.c.h.b16 %v511
        %v765 = vunpack.c.l.b16 %v512
        %v766 = vunpack.c.h.b16 %v512
        %v767 = vunpack.c.l.b16 %v513
        %v768 = vunpack.c.h.b16 %v513
        %v769 = vunpack.c.l.b16 %v514
        %v770 = vunpack.c.h.b16 %v514
        %v771 = vunpack.c.l.b16 %v515
        %v772 = vunpack.c.h.b16 %v515
        %v773 = vunpack.c.l.b16 %v516
        %v774 = vunpack.c.h.b16 %v516
        %v775 = vunpack.c.l.b16 %v517
        %v776 = vunpack.c.h.b16 %v517
        %v777 = vunpack.c.l.b16 %v518
        %v778 = vunpack.c.h.b16 %v518
        %v779 = vunpack.c.l.b16 %v519
        %v780 = vunpack.c.h.b16 %v519
        %v781 = vunpack.c.l.b16 %v520
        %v782 = vunpack.c.h.b16 %v520
        %v783 = vunpack.c.l.b16 %v521
        %v784 = vunpack.c.h.b16 %v521
        %v785 = vunpack.c.l.b16 %v522
        %v786 = vunpack.c.h.b16 %v522
        %v787 = vunpack.c.l.b16 %v523
        %v788 = vunpack.c.h.b16 %v523
        %v789 = vunpack.c.l.b16 %v524
        %v790 = vunpack.c.h.b16 %v524
        %v791 = vunpack.c.l.b16 %v525
        %v792 = vunpack.c.h.b16 %v525
        %v793 = vunpack.c.l.b16 %v526
        %v794 = vunpack.c.h.b16 %v526
        %v795 = vunpack.c.l.b16 %v527
        %v796 = vunpack.c.h.b16 %v527
        %v797 = vunpack.c.l.b16 %v528
        %v798 = vunpack.c.h.b16 %v528
        %v799 = vunpack.c.l.b16 %v529
        %v800 = vunpack.c.h.b16 %v529
        %v801 = vunpack.c.l.b16 %v530
        %v802 = vunpack.c.h.b16 %v530
        %v803 = vunpack.c.l.b16 %v531
        %v804 = vunpack.c.h.b16 %v531
        %v805 = vunpack.c.l.b16 %v532
        %v806 = vunpack.c.h.b16 %v532
        %v807 = vunpack.c.l.b16 %v533
        %v808 = vunpack.c.h.b16 %v533
        %v809 = vunpack.c.l.b16 %v534
        %v810 = vunpack.c.h.b16 %v534
        %v811 = vunpack.c.l.b16 %v535
        %v812 = vunpack.c.h.b16 %v535
        %v813 = vunpack.c.l.b16 %v536
        %v814 = vunpack.c.h.b16 %v536
        %v815 = vunpack.c.l.b16 %v537
        %v816 = vunpack.c.h.b16 %v537
        %v817 = vunpack.c.l.b16 %v538
        %v818 = vunpack.c.h.b16 %v538
        %v819 = vunpack.c.l.b16 %v539
        %v820 = vunpack.c.h.b16 %v539
        %v821 = vunpack.c.l.b16 %v540
        %v822 = vunpack.c.h.b16 %v540
        %v823 = vunpack.c.l.b16 %v541
        %v824 = vunpack.c.h.b16 %v541
        %v825 = vunpack.c.l.b16 %v542
        %v826 = vunpack.c.h.b16 %v542
        %v827 = vunpack.c.l.b16 %v543
        %v828 = vunpack.c.h.b16 %v543
        %v829 = vunpack.c.l.b16 %v544
        %v830 = vunpack.c.h.b16 %v544
        %v831 = vunpack.c.l.b16 %v545
        %v832 = vunpack.c.h.b16 %v545
        %v833 = vunpack.c.l.b16 %v546
        %v834 = vunpack.c.h.b16 %v546
        %v835 = vpack.c.b16 %v711, %v707
        %v836 = vpack.c.b16 %v712, %v708
        %v837 = vpack.c.b16 %v713, %v709
        %v838 = vpack.c.b16 %v714, %v710
        %v839 = vpack.c.b16 %v719, %v715
        %v840 = vpack.c.b16 %v720, %v716
        %v841 = vpack.c.b16 %v721, %v717
        %v842 = vpack.c.b16 %v722, %v718
        %v843 = vpack.c.b16 %v727, %v723
        %v844 = vpack.c.b16 %v728, %v724
        %v845 = vpack.c.b16 %v729, %v725
        %v846 = vpack.c.b16 %v730, %v726
        %v847 = vpack.c.b16 %v735, %v731
        %v848 = vpack.c.b16 %v736, %v732
        %v849 = vpack.c.b16 %v737, %v733
        %v850 = vpack.c.b16 %v738, %v734
        %v851 = vpack.c.b16 %v743, %v739
        %v852 = vpack.c.b16 %v744, %v740
        %v853 = vpack.c.b16 %v745, %v741
        %v854 = vpack.c.b16 %v746, %v742
        %v855 = vpack.c.b16 %v751, %v747
        %v856 = vpack.c.b16 %v752, %v748
        %v857 = vpack.c.b16 %v753, %v749
        %v858 = vpack.c.b16 %v754, %v750
        %v859 = vpack.c.b16 %v759, %v755
        %v860 = vpack.c.b16 %v760, %v756
        %v861 = vpack.c.b16 %v761, %v757
        %v862 = vpack.c.b16 %v762, %v758
        %v863 = vpack.c.b16 %v767, %v763
        %v864 = vpack.c.b16 %v768, %v764
        %v865 = vpack.c.b16 %v769, %v765
        %v866 = vpack.c.b16 %v770, %v766
        %v867 = vpack.c.b16 %v775, %v771
        %v868 = vpack.c.b16 %v776, %v772
        %v869 = vpack.c.b16 %v777, %v773
        %v870 = vpack.c.b16 %v778, %v774
        %v871 = vpack.c.b16 %v783, %v779
        %v872 = vpack.c.b16 %v784, %v780
        %v873 = vpack.c.b16 %v785, %v781
        %v874 = vpack.c.b16 %v786, %v782
        %v875 = vpack.c.b16 %v791, %v787
        %v876 = vpack.c.b16 %v792, %v788
        %v877 = vpack.c.b16 %v793, %v789
        %v878 = vpack.c.b16 %v794, %v790
        %v879 = vpack.c.b16 %v799, %v795
        %v880 = vpack.c.b16 %v800, %v796
        %v881 = vpack.c.b16 %v801, %v797
        %v882 = vpack.c.b16 %v802, %v798
        %v883 = vpack.c.b16 %v807, %v803
        %v884 = vpack.c.b16 %v808, %v804
        %v885 = vpack.c.b16 %v809, %v805
        %v886 = vpack.c.b16 %v810, %v806
        %v887 = vpack.c.b16 %v815, %v811
        %v888 = vpack.c.b16 %v816, %v812
        %v889 = vpack.c.b16 %v817, %v813
        %v890 = vpack.c.b16 %v818, %v814
        %v891 = vpack.c.b16 %v823, %v819
        %v892 = vpack.c.b16 %v824, %v820
        %v893 = vpack.c.b16 %v825, %v821
        %v894 = vpack.c.b16 %v826, %v822
        %v895 = vpack.c.b16 %v831, %v827
        %v896 = vpack.c.b16 %v832, %v828
        %v897 = vpack.c.b16 %v833, %v829
        %v898 = vpack.c.b16 %v834, %v830
        %963 = vmatprep.subr.bf16.mxu0 %v836
        %964 = vmatpush1.bf16.msra.mxu0 %v835
        %965 = vmatprep.subr.bf16.mxu0 %v840
        %966 = vmatpush1.bf16.msra.mxu0 %v839
        %967 = vmatprep.subr.bf16.mxu0 %v844
        %968 = vmatpush1.bf16.msra.mxu0 %v843
        %969 = vmatprep.subr.bf16.mxu0 %v848
        %970 = vmatpush1.bf16.msra.mxu0 %v847
        %971 = vmatprep.subr.bf16.mxu0 %v852
        %972 = vmatpush1.bf16.msra.mxu0 %v851
        %973 = vmatprep.subr.bf16.mxu0 %v856
        %974 = vmatpush1.bf16.msra.mxu0 %v855
        %975 = vmatprep.subr.bf16.mxu0 %v860
        %976 = vmatpush1.bf16.msra.mxu0 %v859
        %977 = vmatprep.subr.bf16.mxu0 %v864
        %978 = vmatpush1.bf16.msra.mxu0 %v863
        %979 = vmatprep.subr.bf16.mxu0 %v868
        %980 = vmatpush1.bf16.msra.mxu0 %v867
        %981 = vmatprep.subr.bf16.mxu0 %v872
        %982 = vmatpush1.bf16.msra.mxu0 %v871
        %983 = vmatprep.subr.bf16.mxu0 %v876
        %984 = vmatpush1.bf16.msra.mxu0 %v875
        %985 = vmatprep.subr.bf16.mxu0 %v880
        %986 = vmatpush1.bf16.msra.mxu0 %v879
        %987 = vmatprep.subr.bf16.mxu0 %v884
        %988 = vmatpush1.bf16.msra.mxu0 %v883
        %989 = vmatprep.subr.bf16.mxu0 %v888
        %990 = vmatpush1.bf16.msra.mxu0 %v887
        %991 = vmatprep.subr.bf16.mxu0 %v892
        %992 = vmatpush1.bf16.msra.mxu0 %v891
        %993 = vmatprep.subr.bf16.mxu0 %v896
        %994 = vmatpush1.bf16.msra.mxu0 %v895
        %995 = vmatprep.mubr.bf16.mxu0 %v628
        %996 = vmatmul.mubr.bf16.gmra.mrb[0].mxu0 %v627
        %v997 = vpop.f32.mrb[0].mxu0
        %v998 = vadd.f32 %v566, %v997
        %v999 = vpop.f32.mrb[0].mxu0
        %v1000 = vadd.f32 %v566, %v999
        %v1001 = vpop.f32.mrb[0].mxu0
        %v1002 = vadd.f32 %v571, %v1001
        %v1003 = vpop.f32.mrb[0].mxu0
        %v1004 = vadd.f32 %v571, %v1003
        %1005 = vmatprep.mubr.bf16.mxu0 %v630
        %1006 = vmatmul.mubr.bf16.gmra.mrb[0].mxu0 %v629
        %v1007 = vpop.f32.mrb[0].mxu0
        %v1008 = vadd.f32 %v576, %v1007
        %v1009 = vpop.f32.mrb[0].mxu0
        %v1010 = vadd.f32 %v576, %v1009
        %v1011 = vpop.f32.mrb[0].mxu0
        %v1012 = vadd.f32 %v581, %v1011
        %v1013 = vpop.f32.mrb[0].mxu0
        %v1014 = vadd.f32 %v581, %v1013
        %1015 = vmatprep.mubr.bf16.mxu0 %v632
        %1016 = vmatmul.mubr.bf16.gmra.mrb[0].mxu0 %v631
        %v1017 = vpop.f32.mrb[0].mxu0
        %v1018 = vadd.f32 %v586, %v1017
        %v1019 = vpop.f32.mrb[0].mxu0
        %v1020 = vadd.f32 %v586, %v1019
        %v1021 = vpop.f32.mrb[0].mxu0
        %v1022 = vadd.f32 %v591, %v1021
        %v1023 = vpop.f32.mrb[0].mxu0
        %v1024 = vadd.f32 %v591, %v1023
        %1025 = vmatprep.mubr.bf16.mxu0 %v634
        %1026 = vmatmul.mubr.bf16.gmra.mrb[0].mxu0 %v633
        %v1027 = vpop.f32.mrb[0].mxu0
        %v1028 = vadd.f32 %v596, %v1027
        %v1029 = vpop.f32.mrb[0].mxu0
        %v1030 = vadd.f32 %v596, %v1029
        %v1031 = vpop.f32.mrb[0].mxu0
        %v1032 = vadd.f32 %v601, %v1031
        %v1033 = vpop.f32.mrb[0].mxu0
        %v1034 = vadd.f32 %v601, %v1033
        %1035 = vdwg.mxu0
        %1036 = vmatprep.subr.bf16.mxu0 %v838
        %1037 = vmatpush1.bf16.msra.mxu0 %v837
        %1038 = vmatprep.subr.bf16.mxu0 %v842
        %1039 = vmatpush1.bf16.msra.mxu0 %v841
        %1040 = vmatprep.subr.bf16.mxu0 %v846
        %1041 = vmatpush1.bf16.msra.mxu0 %v845
        %1042 = vmatprep.subr.bf16.mxu0 %v850
        %1043 = vmatpush1.bf16.msra.mxu0 %v849
        %1044 = vmatprep.subr.bf16.mxu0 %v854
        %1045 = vmatpush1.bf16.msra.mxu0 %v853
        %1046 = vmatprep.subr.bf16.mxu0 %v858
        %1047 = vmatpush1.bf16.msra.mxu0 %v857
        %1048 = vmatprep.subr.bf16.mxu0 %v862
        %1049 = vmatpush1.bf16.msra.mxu0 %v861
        %1050 = vmatprep.subr.bf16.mxu0 %v866
        %1051 = vmatpush1.bf16.msra.mxu0 %v865
        %1052 = vmatprep.subr.bf16.mxu0 %v870
        %1053 = vmatpush1.bf16.msra.mxu0 %v869
        %1054 = vmatprep.subr.bf16.mxu0 %v874
        %1055 = vmatpush1.bf16.msra.mxu0 %v873
        %1056 = vmatprep.subr.bf16.mxu0 %v878
        %1057 = vmatpush1.bf16.msra.mxu0 %v877
        %1058 = vmatprep.subr.bf16.mxu0 %v882
        %1059 = vmatpush1.bf16.msra.mxu0 %v881
        %1060 = vmatprep.subr.bf16.mxu0 %v886
        %1061 = vmatpush1.bf16.msra.mxu0 %v885
        %1062 = vmatprep.subr.bf16.mxu0 %v890
        %1063 = vmatpush1.bf16.msra.mxu0 %v889
        %1064 = vmatprep.subr.bf16.mxu0 %v894
        %1065 = vmatpush1.bf16.msra.mxu0 %v893
        %1066 = vmatprep.subr.bf16.mxu0 %v898
        %1067 = vmatpush1.bf16.msra.mxu0 %v897
        %1068 = vmatprep.mubr.bf16.mxu0 %v628
        %1069 = vmatmul.mubr.bf16.gmra.mrb[0].mxu0 %v627
        %v1070 = vpop.f32.mrb[0].mxu0
        %v1071 = vadd.f32 %v566, %v1070
        %v1072 = vpop.f32.mrb[0].mxu0
        %v1073 = vadd.f32 %v566, %v1072
        %v1074 = vpop.f32.mrb[0].mxu0
        %v1075 = vadd.f32 %v571, %v1074
        %v1076 = vpop.f32.mrb[0].mxu0
        %v1077 = vadd.f32 %v571, %v1076
        %1078 = vmatprep.mubr.bf16.mxu0 %v630
        %1079 = vmatmul.mubr.bf16.gmra.mrb[0].mxu0 %v629
        %v1080 = vpop.f32.mrb[0].mxu0
        %v1081 = vadd.f32 %v576, %v1080
        %v1082 = vpop.f32.mrb[0].mxu0
        %v1083 = vadd.f32 %v576, %v1082
        %v1084 = vpop.f32.mrb[0].mxu0
        %v1085 = vadd.f32 %v581, %v1084
        %v1086 = vpop.f32.mrb[0].mxu0
        %v1087 = vadd.f32 %v581, %v1086
        %1088 = vmatprep.mubr.bf16.mxu0 %v632
        %1089 = vmatmul.mubr.bf16.gmra.mrb[0].mxu0 %v631
        %v1090 = vpop.f32.mrb[0].mxu0
        %v1091 = vadd.f32 %v586, %v1090
        %v1092 = vpop.f32.mrb[0].mxu0
        %v1093 = vadd.f32 %v586, %v1092
        %v1094 = vpop.f32.mrb[0].mxu0
        %v1095 = vadd.f32 %v591, %v1094
        %v1096 = vpop.f32.mrb[0].mxu0
        %v1097 = vadd.f32 %v591, %v1096
        %1098 = vmatprep.mubr.bf16.mxu0 %v634
        %1099 = vmatmul.mubr.bf16.gmra.mrb[0].mxu0 %v633
        %v1100 = vpop.f32.mrb[0].mxu0
        %v1101 = vadd.f32 %v596, %v1100
        %v1102 = vpop.f32.mrb[0].mxu0
        %v1103 = vadd.f32 %v596, %v1102
        %v1104 = vpop.f32.mrb[0].mxu0
        %v1105 = vadd.f32 %v601, %v1104
        %v1106 = vpop.f32.mrb[0].mxu0
        %v1107 = vadd.f32 %v601, %v1106
        %1108 = vdwg.mxu0
        %v1109 = vmax.f32 %v998, 0.0
        %v1110 = vmax.f32 %v1000, 0.0
        %v1111 = vmax.f32 %v1071, 0.0
        %v1112 = vmax.f32 %v1073, 0.0
        %v1113 = vmax.f32 %v1002, 0.0
        %v1114 = vmax.f32 %v1004, 0.0
        %v1115 = vmax.f32 %v1075, 0.0
        %v1116 = vmax.f32 %v1077, 0.0
        %v1117 = vmax.f32 %v1008, 0.0
        %v1118 = vmax.f32 %v1010, 0.0
        %v1119 = vmax.f32 %v1081, 0.0
        %v1120 = vmax.f32 %v1083, 0.0
        %v1121 = vmax.f32 %v1012, 0.0
        %v1122 = vmax.f32 %v1014, 0.0
        %v1123 = vmax.f32 %v1085, 0.0
        %v1124 = vmax.f32 %v1087, 0.0
        %v1125 = vmax.f32 %v1018, 0.0
        %v1126 = vmax.f32 %v1020, 0.0
        %v1127 = vmax.f32 %v1091, 0.0
        %v1128 = vmax.f32 %v1093, 0.0
        %v1129 = vmax.f32 %v1022, 0.0
        %v1130 = vmax.f32 %v1024, 0.0
        %v1131 = vmax.f32 %v1095, 0.0
        %v1132 = vmax.f32 %v1097, 0.0
        %v1133 = vmax.f32 %v1028, 0.0
        %v1134 = vmax.f32 %v1030, 0.0
        %v1135 = vmax.f32 %v1101, 0.0
        %v1136 = vmax.f32 %v1103, 0.0
        %v1137 = vmax.f32 %v1032, 0.0
        %v1138 = vmax.f32 %v1034, 0.0
        %v1139 = vmax.f32 %v1105, 0.0
        %v1140 = vmax.f32 %v1107, 0.0
        %v1141 = vpack.c.bf16 %v1113, %v1109
        %v1142 = vpack.c.bf16 %v1114, %v1110
        %v1143 = vpack.c.bf16 %v1115, %v1111
        %v1144 = vpack.c.bf16 %v1116, %v1112
        %v1145 = vpack.c.bf16 %v1121, %v1117
        %v1146 = vpack.c.bf16 %v1122, %v1118
        %v1147 = vpack.c.bf16 %v1123, %v1119
        %v1148 = vpack.c.bf16 %v1124, %v1120
        %v1149 = vpack.c.bf16 %v1129, %v1125
        %v1150 = vpack.c.bf16 %v1130, %v1126
        %v1151 = vpack.c.bf16 %v1131, %v1127
        %v1152 = vpack.c.bf16 %v1132, %v1128
        %v1153 = vpack.c.bf16 %v1137, %v1133
        %v1154 = vpack.c.bf16 %v1138, %v1134
        %v1155 = vpack.c.bf16 %v1139, %v1135
        %v1156 = vpack.c.bf16 %v1140, %v1136
        %v1157 = vld [vmem:[%s472] sm:$0xf]
        %v1158 = vld [vmem:[%s472 + $0x4] sm:$0xf]
        %v1159 = vld [vmem:[%s472 + $0x8] sm:$0xf]
        %v1160 = vld [vmem:[%s472 + $0xc] sm:$0xf]
        %v1161 = vld [vmem:[%s472 + $0x10] sm:$0xf]
        %v1162 = vld [vmem:[%s472 + $0x14] sm:$0xf]
        %v1163 = vld [vmem:[%s472 + $0x18] sm:$0xf]
        %v1164 = vld [vmem:[%s472 + $0x1c] sm:$0xf]
        %v1165 = vld [vmem:[%s479] sm:$0xff]
        %v1166 = vld [vmem:[%s479 + $0x8] sm:$0xff]
        %v1167 = vld [vmem:[%s479 + $0x10] sm:$0xff]
        %v1168 = vld [vmem:[%s479 + $0x18] sm:$0xff]
        %v1169 = vld [vmem:[%s479 + $0x20] sm:$0xff]
        %v1170 = vld [vmem:[%s479 + $0x28] sm:$0xff]
        %v1171 = vld [vmem:[%s479 + $0x30] sm:$0xff]
        %v1172 = vld [vmem:[%s479 + $0x38] sm:$0xff]
        %1174 = vset.pattern.permute.xlu0 0
        %1175 = vperm.xlu0 %1174, %v1165
        %v1176 = vpop.permute.xlu0 %1175
        %1179 = vset.pattern.permute.xlu0 0
        %1180 = vperm.xlu0 %1179, %v1166
        %v1181 = vpop.permute.xlu0 %1180
        %1184 = vset.pattern.permute.xlu0 0
        %1185 = vperm.xlu0 %1184, %v1167
        %v1186 = vpop.permute.xlu0 %1185
        %1189 = vset.pattern.permute.xlu0 0
        %1190 = vperm.xlu0 %1189, %v1168
        %v1191 = vpop.permute.xlu0 %1190
        %1194 = vset.pattern.permute.xlu0 0
        %1195 = vperm.xlu0 %1194, %v1169
        %v1196 = vpop.permute.xlu0 %1195
        %1199 = vset.pattern.permute.xlu0 0
        %1200 = vperm.xlu0 %1199, %v1170
        %v1201 = vpop.permute.xlu0 %1200
        %1204 = vset.pattern.permute.xlu0 0
        %1205 = vperm.xlu0 %1204, %v1171
        %v1206 = vpop.permute.xlu0 %1205
        %1209 = vset.pattern.permute.xlu0 0
        %1210 = vperm.xlu0 %1209, %v1172
        %v1211 = vpop.permute.xlu0 %1210
        %v1221 = vunpack.c.l.b16 %v1157
        %v1222 = vunpack.c.l.b16 %v1158
        %v1223 = vunpack.c.l.b16 %v1159
        %v1224 = vunpack.c.l.b16 %v1160
        %v1225 = vunpack.c.l.b16 %v1161
        %v1226 = vunpack.c.l.b16 %v1162
        %v1227 = vunpack.c.l.b16 %v1163
        %v1228 = vunpack.c.l.b16 %v1164
        %v1229 = vpack.c.b16 %v1222, %v1221
        %v1230 = vpack.c.b16 %v1224, %v1223
        %v1231 = vpack.c.b16 %v1226, %v1225
        %v1232 = vpack.c.b16 %v1228, %v1227
        %vm1233 = vcmask 523264
        %v1235 = vsel %vm1233, %v1229, 0
        %v1238 = vsel %vm1233, %v1230, 0
        %v1241 = vsel %vm1233, %v1231, 0
        %v1244 = vsel %vm1233, %v1232, 0
        %1246 = vmatprep.subr.bf16.mxu0 %v1142
        %1247 = vmatpush1.bf16.msra.mxu0 %v1141
        %1248 = vmatprep.subr.bf16.mxu0 %v1146
        %1249 = vmatpush1.bf16.msra.mxu0 %v1145
        %1250 = vmatprep.subr.bf16.mxu0 %v1150
        %1251 = vmatpush1.bf16.msra.mxu0 %v1149
        %1252 = vmatprep.subr.bf16.mxu0 %v1154
        %1253 = vmatpush1.bf16.msra.mxu0 %v1153
        %1254 = vmatprep.subr.bf16.mxu0 0
        %1255 = vmatpush1.bf16.msra.mxu0 0
        %1256 = vmatprep.subr.bf16.mxu0 0
        %1257 = vmatpush1.bf16.msra.mxu0 0
        %1258 = vmatprep.subr.bf16.mxu0 0
        %1259 = vmatpush1.bf16.msra.mxu0 0
        %1260 = vmatprep.subr.bf16.mxu0 0
        %1261 = vmatpush1.bf16.msra.mxu0 0
        %1262 = vmatprep.subr.bf16.mxu0 0
        %1263 = vmatpush1.bf16.msra.mxu0 0
        %1264 = vmatprep.subr.bf16.mxu0 0
        %1265 = vmatpush1.bf16.msra.mxu0 0
        %1266 = vmatprep.subr.bf16.mxu0 0
        %1267 = vmatpush1.bf16.msra.mxu0 0
        %1268 = vmatprep.subr.bf16.mxu0 0
        %1269 = vmatpush1.bf16.msra.mxu0 0
        %1270 = vmatprep.subr.bf16.mxu0 0
        %1271 = vmatpush1.bf16.msra.mxu0 0
        %1272 = vmatprep.subr.bf16.mxu0 0
        %1273 = vmatpush1.bf16.msra.mxu0 0
        %1274 = vmatprep.subr.bf16.mxu0 0
        %1275 = vmatpush1.bf16.msra.mxu0 0
        %1276 = vmatprep.subr.bf16.mxu0 0
        %1277 = vmatpush1.bf16.msra.mxu0 0
        %1278 = vmatprep.mubr.bf16.mxu0 0
        %1279 = vmatmul.mubr.bf16.gmra.mrb[0].mxu0 %v1235
        %v1280 = vpop.f32.mrb[0].mxu0
        %v1281 = vadd.f32 %v1176, %v1280
        %v1282 = vpop.f32.mrb[0].mxu0
        %v1283 = vadd.f32 %v1176, %v1282
        %v1284 = vpop.f32.mrb[0].mxu0
        %v1285 = vadd.f32 %v1181, %v1284
        %v1286 = vpop.f32.mrb[0].mxu0
        %v1287 = vadd.f32 %v1181, %v1286
        %1288 = vmatprep.mubr.bf16.mxu0 0
        %1289 = vmatmul.mubr.bf16.gmra.mrb[0].mxu0 %v1238
        %v1290 = vpop.f32.mrb[0].mxu0
        %v1291 = vadd.f32 %v1186, %v1290
        %v1292 = vpop.f32.mrb[0].mxu0
        %v1293 = vadd.f32 %v1186, %v1292
        %v1294 = vpop.f32.mrb[0].mxu0
        %v1295 = vadd.f32 %v1191, %v1294
        %v1296 = vpop.f32.mrb[0].mxu0
        %v1297 = vadd.f32 %v1191, %v1296
        %1298 = vmatprep.mubr.bf16.mxu0 0
        %1299 = vmatmul.mubr.bf16.gmra.mrb[0].mxu0 %v1241
        %v1300 = vpop.f32.mrb[0].mxu0
        %v1301 = vadd.f32 %v1196, %v1300
        %v1302 = vpop.f32.mrb[0].mxu0
        %v1303 = vadd.f32 %v1196, %v1302
        %v1304 = vpop.f32.mrb[0].mxu0
        %v1305 = vadd.f32 %v1201, %v1304
        %v1306 = vpop.f32.mrb[0].mxu0
        %v1307 = vadd.f32 %v1201, %v1306
        %1308 = vmatprep.mubr.bf16.mxu0 0
        %1309 = vmatmul.mubr.bf16.gmra.mrb[0].mxu0 %v1244
        %v1310 = vpop.f32.mrb[0].mxu0
        %v1311 = vadd.f32 %v1206, %v1310
        %v1312 = vpop.f32.mrb[0].mxu0
        %v1313 = vadd.f32 %v1206, %v1312
        %v1314 = vpop.f32.mrb[0].mxu0
        %v1315 = vadd.f32 %v1211, %v1314
        %v1316 = vpop.f32.mrb[0].mxu0
        %v1317 = vadd.f32 %v1211, %v1316
        %1318 = vdwg.mxu0
        %1319 = vmatprep.subr.bf16.mxu0 %v1144
        %1320 = vmatpush1.bf16.msra.mxu0 %v1143
        %1321 = vmatprep.subr.bf16.mxu0 %v1148
        %1322 = vmatpush1.bf16.msra.mxu0 %v1147
        %1323 = vmatprep.subr.bf16.mxu0 %v1152
        %1324 = vmatpush1.bf16.msra.mxu0 %v1151
        %1325 = vmatprep.subr.bf16.mxu0 %v1156
        %1326 = vmatpush1.bf16.msra.mxu0 %v1155
        %1327 = vmatprep.subr.bf16.mxu0 0
        %1328 = vmatpush1.bf16.msra.mxu0 0
        %1329 = vmatprep.subr.bf16.mxu0 0
        %1330 = vmatpush1.bf16.msra.mxu0 0
        %1331 = vmatprep.subr.bf16.mxu0 0
        %1332 = vmatpush1.bf16.msra.mxu0 0
        %1333 = vmatprep.subr.bf16.mxu0 0
        %1334 = vmatpush1.bf16.msra.mxu0 0
        %1335 = vmatprep.subr.bf16.mxu0 0
        %1336 = vmatpush1.bf16.msra.mxu0 0
        %1337 = vmatprep.subr.bf16.mxu0 0
        %1338 = vmatpush1.bf16.msra.mxu0 0
        %1339 = vmatprep.subr.bf16.mxu0 0
        %1340 = vmatpush1.bf16.msra.mxu0 0
        %1341 = vmatprep.subr.bf16.mxu0 0
        %1342 = vmatpush1.bf16.msra.mxu0 0
        %1343 = vmatprep.subr.bf16.mxu0 0
        %1344 = vmatpush1.bf16.msra.mxu0 0
        %1345 = vmatprep.subr.bf16.mxu0 0
        %1346 = vmatpush1.bf16.msra.mxu0 0
        %1347 = vmatprep.subr.bf16.mxu0 0
        %1348 = vmatpush1.bf16.msra.mxu0 0
        %1349 = vmatprep.subr.bf16.mxu0 0
        %1350 = vmatpush1.bf16.msra.mxu0 0
        %1351 = vmatprep.mubr.bf16.mxu0 0
        %1352 = vmatmul.mubr.bf16.gmra.mrb[0].mxu0 %v1235
        %v1353 = vpop.f32.mrb[0].mxu0
        %v1354 = vadd.f32 %v1176, %v1353
        %v1355 = vpop.f32.mrb[0].mxu0
        %v1356 = vadd.f32 %v1176, %v1355
        %v1357 = vpop.f32.mrb[0].mxu0
        %v1358 = vadd.f32 %v1181, %v1357
        %v1359 = vpop.f32.mrb[0].mxu0
        %v1360 = vadd.f32 %v1181, %v1359
        %1361 = vmatprep.mubr.bf16.mxu0 0
        %1362 = vmatmul.mubr.bf16.gmra.mrb[0].mxu0 %v1238
        %v1363 = vpop.f32.mrb[0].mxu0
        %v1364 = vadd.f32 %v1186, %v1363
        %v1365 = vpop.f32.mrb[0].mxu0
        %v1366 = vadd.f32 %v1186, %v1365
        %v1367 = vpop.f32.mrb[0].mxu0
        %v1368 = vadd.f32 %v1191, %v1367
        %v1369 = vpop.f32.mrb[0].mxu0
        %v1370 = vadd.f32 %v1191, %v1369
        %1371 = vmatprep.mubr.bf16.mxu0 0
        %1372 = vmatmul.mubr.bf16.gmra.mrb[0].mxu0 %v1241
        %v1373 = vpop.f32.mrb[0].mxu0
        %v1374 = vadd.f32 %v1196, %v1373
        %v1375 = vpop.f32.mrb[0].mxu0
        %v1376 = vadd.f32 %v1196, %v1375
        %v1377 = vpop.f32.mrb[0].mxu0
        %v1378 = vadd.f32 %v1201, %v1377
        %v1379 = vpop.f32.mrb[0].mxu0
        %v1380 = vadd.f32 %v1201, %v1379
        %1381 = vmatprep.mubr.bf16.mxu0 0
        %1382 = vmatmul.mubr.bf16.gmra.mrb[0].mxu0 %v1244
        %v1383 = vpop.f32.mrb[0].mxu0
        %v1384 = vadd.f32 %v1206, %v1383
        %v1385 = vpop.f32.mrb[0].mxu0
        %v1386 = vadd.f32 %v1206, %v1385
        %v1387 = vpop.f32.mrb[0].mxu0
        %v1388 = vadd.f32 %v1211, %v1387
        %v1389 = vpop.f32.mrb[0].mxu0
        %v1390 = vadd.f32 %v1211, %v1389
        %1391 = vdwg.mxu0
        %v1392 = vmax.f32 %v1281, 0.0
        %v1393 = vmax.f32 %v1283, 0.0
        %v1394 = vmax.f32 %v1354, 0.0
        %v1395 = vmax.f32 %v1356, 0.0
        %v1396 = vmax.f32 %v1285, 0.0
        %v1397 = vmax.f32 %v1287, 0.0
        %v1398 = vmax.f32 %v1358, 0.0
        %v1399 = vmax.f32 %v1360, 0.0
        %v1400 = vmax.f32 %v1291, 0.0
        %v1401 = vmax.f32 %v1293, 0.0
        %v1402 = vmax.f32 %v1364, 0.0
        %v1403 = vmax.f32 %v1366, 0.0
        %v1404 = vmax.f32 %v1295, 0.0
        %v1405 = vmax.f32 %v1297, 0.0
        %v1406 = vmax.f32 %v1368, 0.0
        %v1407 = vmax.f32 %v1370, 0.0
        %v1408 = vmax.f32 %v1301, 0.0
        %v1409 = vmax.f32 %v1303, 0.0
        %v1410 = vmax.f32 %v1374, 0.0
        %v1411 = vmax.f32 %v1376, 0.0
        %v1412 = vmax.f32 %v1305, 0.0
        %v1413 = vmax.f32 %v1307, 0.0
        %v1414 = vmax.f32 %v1378, 0.0
        %v1415 = vmax.f32 %v1380, 0.0
        %v1416 = vmax.f32 %v1311, 0.0
        %v1417 = vmax.f32 %v1313, 0.0
        %v1418 = vmax.f32 %v1384, 0.0
        %v1419 = vmax.f32 %v1386, 0.0
        %v1420 = vmax.f32 %v1315, 0.0
        %v1421 = vmax.f32 %v1317, 0.0
        %v1422 = vmax.f32 %v1388, 0.0
        %v1423 = vmax.f32 %v1390, 0.0
        %1424 = vst [vmem:[%s451] sm:$0xff] %v1392
        %1425 = vst [vmem:[%s451 + $0x8] sm:$0xff] %v1393
        %1426 = vst [vmem:[%s451 + $0x10] sm:$0xff] %v1394
        %1427 = vst [vmem:[%s451 + $0x18] sm:$0xff] %v1395
        %1428 = vst [vmem:[%s451 + $0x20] sm:$0xff] %v1396
        %1429 = vst [vmem:[%s451 + $0x28] sm:$0xff] %v1397
        %1430 = vst [vmem:[%s451 + $0x30] sm:$0xff] %v1398
        %1431 = vst [vmem:[%s451 + $0x38] sm:$0xff] %v1399
        %1432 = vst [vmem:[%s451 + $0x40] sm:$0xff] %v1400
        %1433 = vst [vmem:[%s451 + $0x48] sm:$0xff] %v1401
        %1434 = vst [vmem:[%s451 + $0x50] sm:$0xff] %v1402
        %1435 = vst [vmem:[%s451 + $0x58] sm:$0xff] %v1403
        %1436 = vst [vmem:[%s451 + $0x60] sm:$0xff] %v1404
        %1437 = vst [vmem:[%s451 + $0x68] sm:$0xff] %v1405
        %1438 = vst [vmem:[%s451 + $0x70] sm:$0xff] %v1406
        %1439 = vst [vmem:[%s451 + $0x78] sm:$0xff] %v1407
        %1440 = vst [vmem:[%s451 + $0x80] sm:$0xff] %v1408
        %1441 = vst [vmem:[%s451 + $0x88] sm:$0xff] %v1409
        %1442 = vst [vmem:[%s451 + $0x90] sm:$0xff] %v1410
        %1443 = vst [vmem:[%s451 + $0x98] sm:$0xff] %v1411
        %1444 = vst [vmem:[%s451 + $0xa0] sm:$0xff] %v1412
        %1445 = vst [vmem:[%s451 + $0xa8] sm:$0xff] %v1413
        %1446 = vst [vmem:[%s451 + $0xb0] sm:$0xff] %v1414
        %1447 = vst [vmem:[%s451 + $0xb8] sm:$0xff] %v1415
        %1448 = vst [vmem:[%s451 + $0xc0] sm:$0xff] %v1416
        %1449 = vst [vmem:[%s451 + $0xc8] sm:$0xff] %v1417
        %1450 = vst [vmem:[%s451 + $0xd0] sm:$0xff] %v1418
        %1451 = vst [vmem:[%s451 + $0xd8] sm:$0xff] %v1419
        %1452 = vst [vmem:[%s451 + $0xe0] sm:$0xff] %v1420
        %1453 = vst [vmem:[%s451 + $0xe8] sm:$0xff] %v1421
        %1454 = vst [vmem:[%s451 + $0xf0] sm:$0xff] %v1422
        %1455 = vst [vmem:[%s451 + $0xf8] sm:$0xff] %v1423
        %s1456 = sand.u32 %s169, 1
        %s1457 = sand.u32 %s169, 1
        %s1458 = smul.addr %s1457, 256
        %s1459 = scalar_lea.vmem [#allocation5], %s1458
        // Predicated region
        $region64: #{poly_transform_forward.1} parent=58 // pred_check
          %p1460 = pneg %p179
        $region65: #{poly_transform_forward.1} parent=58 // pred_check_branch
          %1462 = sbr.rel (%p1460) target = $region67
        $region66: #{poly_transform_forward.1} parent=58 // pred_region
          %s1463 = smul.u32 4, %s23
          %s1464 = smul.addr %s1463, 8
          %s1465 = scalar_lea.vmem %s6, %s1464
          // Predicated region
          $region68: #{poly_transform_forward.1} parent=66 // pred_check
            _
          $region69: #{poly_transform_forward.1} parent=66 // pred_check_branch
            %1467 = sbr.rel (0) target = $region71
          $region70: #{poly_transform_forward.1} parent=66 // pred_region
            // Predicated region
            $region72: #{poly_transform_forward.1} parent=70 // pred_check
              _
            $region73: #{poly_transform_forward.1} parent=70 // pred_check_branch
              %1469 = sbr.rel (0) target = $region75
            $region74: #{poly_transform_forward.1} parent=70 // pred_region
              loop: start=0, step=1, limit=1
              $region76: #{poly_transform_forward.1} parent=74 // loop_pre_header
                _
              $region77: #{poly_transform_forward.1} parent=74 // loop_header
                %s1471 = sphi 0, %s1475
                %p1472 = scmp.ge.s32.totalorder %s1471, 1
                %s1476 = sphi %s1459, %s1459
                %s1477 = sphi %s1465, %s1465
              $region78: #{poly_transform_forward.1} parent=74 // loop_header_branch
                %1474 = sbr.rel (%p1472) target = $region82
              $region79: #{poly_transform_forward.1} parent=74 // loop_body
                %v1478 = vld [vmem:[%s1476] sm:$0xff]
                %1479 = vst [vmem:[%s1477] sm:$0xff] %v1478
                %v1480 = vld [vmem:[%s1476 + $0x8] sm:$0xff]
                %1481 = vst [vmem:[%s1477 + $0x8] sm:$0xff] %v1480
                %v1482 = vld [vmem:[%s1476 + $0x10] sm:$0xff]
                %1483 = vst [vmem:[%s1477 + $0x10] sm:$0xff] %v1482
                %v1484 = vld [vmem:[%s1476 + $0x18] sm:$0xff]
                %1485 = vst [vmem:[%s1477 + $0x18] sm:$0xff] %v1484
                %v1486 = vld [vmem:[%s1476 + $0x20] sm:$0xff]
                %1487 = vst [vmem:[%s1477 + $0xa0] sm:$0xff] %v1486
                %v1488 = vld [vmem:[%s1476 + $0x28] sm:$0xff]
                %1489 = vst [vmem:[%s1477 + $0xa8] sm:$0xff] %v1488
                %v1490 = vld [vmem:[%s1476 + $0x30] sm:$0xff]
                %1491 = vst [vmem:[%s1477 + $0xb0] sm:$0xff] %v1490
                %v1492 = vld [vmem:[%s1476 + $0x38] sm:$0xff]
                %1493 = vst [vmem:[%s1477 + $0xb8] sm:$0xff] %v1492
                %v1494 = vld [vmem:[%s1476 + $0x40] sm:$0xff]
                %1495 = vst [vmem:[%s1477 + $0x140] sm:$0xff] %v1494
                %v1496 = vld [vmem:[%s1476 + $0x48] sm:$0xff]
                %1497 = vst [vmem:[%s1477 + $0x148] sm:$0xff] %v1496
                %v1498 = vld [vmem:[%s1476 + $0x50] sm:$0xff]
                %1499 = vst [vmem:[%s1477 + $0x150] sm:$0xff] %v1498
                %v1500 = vld [vmem:[%s1476 + $0x58] sm:$0xff]
                %1501 = vst [vmem:[%s1477 + $0x158] sm:$0xff] %v1500
                %v1502 = vld [vmem:[%s1476 + $0x60] sm:$0xff]
                %1503 = vst [vmem:[%s1477 + $0x1e0] sm:$0xff] %v1502
                %v1504 = vld [vmem:[%s1476 + $0x68] sm:$0xff]
                %1505 = vst [vmem:[%s1477 + $0x1e8] sm:$0xff] %v1504
                %v1506 = vld [vmem:[%s1476 + $0x70] sm:$0xff]
                %1507 = vst [vmem:[%s1477 + $0x1f0] sm:$0xff] %v1506
                %v1508 = vld [vmem:[%s1476 + $0x78] sm:$0xff]
                %1509 = vst [vmem:[%s1477 + $0x1f8] sm:$0xff] %v1508
                %v1510 = vld [vmem:[%s1476 + $0x80] sm:$0xff]
                %1511 = vst [vmem:[%s1477 + $0x280] sm:$0xff] %v1510
                %v1512 = vld [vmem:[%s1476 + $0x88] sm:$0xff]
                %1513 = vst [vmem:[%s1477 + $0x288] sm:$0xff] %v1512
                %v1514 = vld [vmem:[%s1476 + $0x90] sm:$0xff]
                %1515 = vst [vmem:[%s1477 + $0x290] sm:$0xff] %v1514
                %v1516 = vld [vmem:[%s1476 + $0x98] sm:$0xff]
                %1517 = vst [vmem:[%s1477 + $0x298] sm:$0xff] %v1516
                %v1518 = vld [vmem:[%s1476 + $0xa0] sm:$0xff]
                %1519 = vst [vmem:[%s1477 + $0x320] sm:$0xff] %v1518
                %v1520 = vld [vmem:[%s1476 + $0xa8] sm:$0xff]
                %1521 = vst [vmem:[%s1477 + $0x328] sm:$0xff] %v1520
                %v1522 = vld [vmem:[%s1476 + $0xb0] sm:$0xff]
                %1523 = vst [vmem:[%s1477 + $0x330] sm:$0xff] %v1522
                %v1524 = vld [vmem:[%s1476 + $0xb8] sm:$0xff]
                %1525 = vst [vmem:[%s1477 + $0x338] sm:$0xff] %v1524
                %v1526 = vld [vmem:[%s1476 + $0xc0] sm:$0xff]
                %1527 = vst [vmem:[%s1477 + $0x3c0] sm:$0xff] %v1526
                %v1528 = vld [vmem:[%s1476 + $0xc8] sm:$0xff]
                %1529 = vst [vmem:[%s1477 + $0x3c8] sm:$0xff] %v1528
                %v1530 = vld [vmem:[%s1476 + $0xd0] sm:$0xff]
                %1531 = vst [vmem:[%s1477 + $0x3d0] sm:$0xff] %v1530
                %v1532 = vld [vmem:[%s1476 + $0xd8] sm:$0xff]
                %1533 = vst [vmem:[%s1477 + $0x3d8] sm:$0xff] %v1532
                %v1534 = vld [vmem:[%s1476 + $0xe0] sm:$0xff]
                %1535 = vst [vmem:[%s1477 + $0x460] sm:$0xff] %v1534
                %v1536 = vld [vmem:[%s1476 + $0xe8] sm:$0xff]
                %1537 = vst [vmem:[%s1477 + $0x468] sm:$0xff] %v1536
                %v1538 = vld [vmem:[%s1476 + $0xf0] sm:$0xff]
                %1539 = vst [vmem:[%s1477 + $0x470] sm:$0xff] %v1538
                %v1540 = vld [vmem:[%s1476 + $0xf8] sm:$0xff]
                %1541 = vst [vmem:[%s1477 + $0x478] sm:$0xff] %v1540
              $region80: #{poly_transform_forward.1} parent=74 // loop_footer
                %s1475 = sadd.s32 1, %s1471
              $region81: #{poly_transform_forward.1} parent=74 // loop_footer_branch
                %1470 = sbr.rel target = $region77
              $region82: #{poly_transform_forward.1} parent=74 // loop_exit
                _
            $region75: #{poly_transform_forward.1} parent=70 // pred_fallthru
              _
            // Predicated region
            $region83: #{poly_transform_forward.1} parent=70 // pred_check
              _
            $region84: #{poly_transform_forward.1} parent=70 // pred_check_branch
              %1543 = sbr.rel target = $region86
            $region85: #{poly_transform_forward.1} parent=70 // pred_region
              _
            $region86: #{poly_transform_forward.1} parent=70 // pred_fallthru
              _
          $region71: #{poly_transform_forward.1} parent=66 // pred_fallthru
            _
          %1544 = vnop
        $region67: #{poly_transform_forward.1} parent=58 // pred_fallthru
          _
      $region59: #{poly_transform_forward.1} parent=5 // pred_fallthru
        _
      %p1545 = scmp.le.s32.totalorder 2, %s18
      // Predicated region
      $region87: #{poly_transform_forward.1} parent=5 // pred_check
        %p1546 = pneg %p1545
      $region88: #{poly_transform_forward.1} parent=5 // pred_check_branch
        %1548 = sbr.rel (%p1546) target = $region90
      $region89: #{poly_transform_forward.1} parent=5 // pred_region
        %s1549 = ssub.s32 %s18, 2
        // Predicated region
        $region91: #{poly_transform_forward.1} parent=89 // pred_check
          %p1550 = pneg %p185
        $region92: #{poly_transform_forward.1} parent=89 // pred_check_branch
          %1552 = sbr.rel (%p1550) target = $region94
        $region93: #{poly_transform_forward.1} parent=89 // pred_region
          %s1553 = sand.u32 %s170, 1
          %s1554 = sand.u32 %s170, 1
          %s1555 = smul.addr %s1554, 256
          %s1556 = scalar_lea.vmem [#allocation5], %s1555
        $region94: #{poly_transform_forward.1} parent=89 // pred_fallthru
          _
      $region90: #{poly_transform_forward.1} parent=5 // pred_fallthru
        _
    $region6: #{poly_transform_forward.1} parent=1 // loop_footer
      %s22 = sadd.s32 1, %s18
    $region7: #{poly_transform_forward.1} parent=1 // loop_footer_branch
      %17 = sbr.rel target = $region3
    $region8: #{poly_transform_forward.1} parent=1 // loop_exit
      _

</llo_original>
